<compile_context>
chip_gen: v7x
topology: tpu7x:2x2x1
jax: 0.10.0
libtpu: 0.0.40
codegen_flags: <defaults>
</compile_context>

<pallas_src>
import jax
import jax.numpy as jnp
from jax.experimental import pallas as pl
from jax.experimental.pallas import tpu as pltpu


_LANE = 128
_SUBLANE = 8
# ~2 MiB per tile: large enough to amortize the ~0.35 us per-grid-step
# overhead, small enough that 2x double-buffered input + output stays well
# inside the 16/32/32 MiB scoped-VMEM defaults (v5e/v6e/v7x).
_TARGET_BLOCK_BYTES = 2 << 20
# Below this, plain XLA fused add already hits the HBM roofline.
_SMALL_BYPASS_BYTES = 1 << 20


def _add_scalar_bias_kernel(bias_ref, w_ref, o_ref):
    # bias_ref: SMEM [1] f32 scalar; w_ref / o_ref: VMEM tiles (same shape).
    # Shapes come entirely from the refs -> works for any block/grid choice.
    o_ref[...] = (w_ref[...] + bias_ref[0]).astype(o_ref.dtype)


def _round_down_mult(x, m):
    return max(m, (x // m) * m)


def _round_up_mult(x, m):
    return ((x + m - 1) // m) * m


def _tiled_bias_add(w2, bias_arr, block_shape, grid, index_map):
    """Grid-parallel streaming add of an SMEM scalar onto a 2-D slab."""
    M, N = w2.shape
    itemsize = w2.dtype.itemsize
    cost = pl.CostEstimate(
        flops=M * N,
        transcendentals=0,
        bytes_accessed=2 * M * N * itemsize + 4,
    )
    return pl.pallas_call(
        _add_scalar_bias_kernel,
        out_shape=jax.ShapeDtypeStruct((M, N), w2.dtype),
        grid=grid,
        in_specs=[
            # Scalar bias: SMEM, whole array, no per-step DMA / VMEM buffer.
            pl.BlockSpec(memory_space=pltpu.MemorySpace.SMEM),
            pl.BlockSpec(block_shape, index_map),
        ],
        out_specs=pl.BlockSpec(block_shape, index_map),
        # "parallel" lets the row axis shard across TensorCores where
        # supported; on v7x, pltpu.CORE_PARALLEL on this axis is a candidate
        # further win for this bandwidth-bound stream.
        compiler_params=pltpu.CompilerParams(
            dimension_semantics=("parallel",)),
        cost_estimate=cost,
    )(bias_arr, w2)


def weights_forward(weight, bias=None):
    """Pallas implementation of Weights.forward (the input `_` is ignored).

    bias is None      -> do_bias == False : identity on the parameter.
    bias is length-1  -> do_bias == True  : weight + bias (scalar broadcast).
    """
    weight = jnp.asarray(weight)
    if bias is None:
        return weight

    # Bias kept as an f32 SMEM scalar (exact for the module's f32 params).
    bias_arr = jnp.asarray(bias, dtype=jnp.float32).reshape((1,))
    total = int(weight.size)
    itemsize = weight.dtype.itemsize
    orig_shape = weight.shape

    # Small-tensor bypass: the fused XLA add is already roofline-bound.
    if total * itemsize < _SMALL_BYPASS_BYTES:
        return (weight + bias_arr[0]).astype(weight.dtype)

    if total % _LANE == 0:
        # Preferred path: flatten to a lane-dense slab, independent of the
        # logical last dim -> unmasked vector stores for (almost) any shape.
        lane_width = _LANE
        for cand in (4096, 2048, 1024, 512, 256):
            if total % cand == 0:
                lane_width = cand
                break
        M, N = total // lane_width, lane_width
        w2 = weight.reshape(M, N)
        bm = _round_down_mult(_TARGET_BLOCK_BYTES // (N * itemsize), _SUBLANE)
        bm = min(bm, _round_up_mult(M, _SUBLANE))
        out2 = _tiled_bias_add(
            w2, bias_arr, (bm, N), (pl.cdiv(M, bm),), lambda i: (i, 0))
    elif weight.ndim >= 2:
        # Unaligned total: keep the logical last dim (full-extent exception)
        # but still row-tile so large weights never need one giant VMEM block.
        N = orig_shape[-1]
        M = total // N
        w2 = weight.reshape(M, N)
        bm = _round_down_mult(_TARGET_BLOCK_BYTES // (N * itemsize), _SUBLANE)
        bm = min(bm, _round_up_mult(M, _SUBLANE))
        out2 = _tiled_bias_add(
            w2, bias_arr, (bm, N), (pl.cdiv(M, bm),), lambda i: (i, 0))
    else:
        # 1-D parameter with an odd element count: tile along lanes.
        w2 = weight.reshape(1, total)
        bn = _round_down_mult(_TARGET_BLOCK_BYTES // itemsize, _LANE)
        bn = min(bn, _round_up_mult(total, _LANE))
        out2 = _tiled_bias_add(
            w2, bias_arr, (1, bn), (pl.cdiv(total, bn),), lambda j: (0, j))

    return out2.reshape(orig_shape)


if __name__ == "__main__":
    key = jax.random.PRNGKey(0)
    kw1, kw2, kw3, kb = jax.random.split(key, 4)

    # --- module as initialized (small shape): bypass path -------------------
    shape0 = (64, 256)
    fill_value = 0.5
    w0 = jnp.full(shape0, fill_value, dtype=jnp.float32)
    b0 = jnp.zeros((1,), dtype=jnp.float32)
    out0 = jax.block_until_ready(weights_forward(w0, b0))
    assert out0.shape == shape0
    assert jnp.allclose(out0, w0 + b0, atol=1e-6, rtol=1e-6)

    bias = jax.random.normal(kb, (1,), dtype=jnp.float32)

    # --- lane-dense tiled path, multi-step grid ------------------------------
    w1 = jax.random.normal(kw1, (1024, 2048), dtype=jnp.float32)   # 8 MiB
    out1 = jax.block_until_ready(weights_forward(w1, bias))
    assert out1.shape == w1.shape
    assert jnp.allclose(out1, w1 + bias, atol=1e-6, rtol=1e-6)

    # --- last dim not a multiple of 128, flattened to a lane-dense slab ------
    w2 = jax.random.normal(kw2, (768, 384), dtype=jnp.float32)
    out2 = jax.block_until_ready(weights_forward(w2, bias))
    assert jnp.allclose(out2, w2 + bias, atol=1e-6, rtol=1e-6)

    # --- fully unaligned shape: row-tiled fallback (full last dim) -----------
    w3 = jax.random.normal(kw3, (2049, 129), dtype=jnp.float32)
    out3 = jax.block_until_ready(weights_forward(w3, bias))
    assert jnp.allclose(out3, w3 + bias, atol=1e-6, rtol=1e-6)

    # --- do_bias == False: pure pass-through of the parameter ---------------
    out_nb = jax.block_until_ready(weights_forward(w1, None))
    assert jnp.allclose(out_nb, w1), "no-bias path must return weight"

    print("KERNEL_OK")
</pallas_src>

<mosaic_0001>
module attributes {stable_mosaic.version = 11 : i64} {
  func.func @_add_scalar_bias_kernel(%arg0: i32, %arg1: memref<1xf32, #tpu.memory_space<smem>>, %arg2: memref<128x4096xf32, #tpu.memory_space<vmem>>, %arg3: memref<128x4096xf32, #tpu.memory_space<vmem>>) attributes {dimension_semantics = [#tpu.dimension_semantics<parallel>], iteration_bounds = array<i64: 4>, scalar_prefetch = 0 : i64, scratch_operands = 0 : i64, tpu.core_type = #tpu.core_type<tc>, window_params = [{transform_indices = @transform_0, window_bounds = array<i64: 1>}, {transform_indices = @transform_1, window_bounds = array<i64: 128, 4096>}, {transform_indices = @transform_2, window_bounds = array<i64: 128, 4096>}]} {
    %c0 = arith.constant 0 : index
    %c0_0 = arith.constant 0 : index
    %0 = vector.load %arg2[%c0, %c0_0] : memref<128x4096xf32, #tpu.memory_space<vmem>>, vector<128x4096xf32>
    %c0_1 = arith.constant 0 : index
    %1 = memref.load %arg1[%c0_1] : memref<1xf32, #tpu.memory_space<smem>>
    %2 = vector.broadcast %1 : f32 to vector<128x4096xf32>
    %3 = arith.addf %0, %2 : vector<128x4096xf32>
    %c0_2 = arith.constant 0 : index
    %c0_3 = arith.constant 0 : index
    %4 = vector.load %arg3[%c0_2, %c0_3] : memref<128x4096xf32, #tpu.memory_space<vmem>>, vector<128x4096xf32>
    tpu.vector_store %arg3[%c0_2, %c0_3], %3 {strides = array<i32>} : memref<128x4096xf32, #tpu.memory_space<vmem>>, vector<128x4096xf32>,
    return
  }
  func.func @transform_0(%arg0: i32) -> i32 {
    %c0_i32 = arith.constant 0 : i32
    %c0_i32_0 = arith.constant 0 : i32
    return %c0_i32 : i32
  }
  func.func @transform_1(%arg0: i32) -> (i32, i32) {
    %c0_i32 = arith.constant 0 : i32
    %c0_i32_0 = arith.constant 0 : i32
    return %arg0, %c0_i32 : i32, i32
  }
  func.func @transform_2(%arg0: i32) -> (i32, i32) {
    %c0_i32 = arith.constant 0 : i32
    %c0_i32_0 = arith.constant 0 : i32
    return %arg0, %c0_i32 : i32, i32
  }
}

</mosaic_0001>

<llo_original>
// kernel: tpu_custom_call.1
$region0: #{tpu_custom_call.1}
  #allocation0 [shape = 'u32[]', space=smem, size = 0x4, offset = 0x4, fixed_abs, tag = 'smem constant byte address 0x4 - core index']
  #allocation1 [shape = 'u32[144,128]{1,0:T(1,128)}', space=vmem, size = 0x12000, scoped, tag = 'internal scratch']
  #allocation2 [shape = 'f32[1]{0:T(128)S(6)}', space=smem, size = 0x200, scoped, tag = 'scoped memory for tpu_custom_call.1']
  %s0 = inlined_call_operand.<no memory space> [shape: f32[1], index: 0, kind: input, shape index: {}]
  %s1 = inlined_call_operand.hbm [shape: f32[512,4096], index: 1, kind: input, shape index: {}]
  %s2 = inlined_call_operand.hbm [shape: f32[512,4096], index: 2, kind: output, shape index: {}]
  %s3 = sld [smem:[#allocation0]]
  $region45: #{tpu_custom_call.1} parent=0
    _
  %s5 = ssub.s32 1, %s3
  %s6 = scalar_select 0, %s5, %s3
  %7 = sst [smem:[#allocation2]] %s0
  $region1: #{tpu_custom_call.1} parent=0
    #allocation3 [shape = 'u8[4194304]{0}', space=vmem, size = 0x400000, scoped, tag = 'input window, operand 1']
    #allocation4 [shape = 's32[2]{0}', space=sflag, size = 0x8, scoped, tag = 'scoped memory for tpu_custom_call.1']
    #allocation5 [shape = 's32[2]{0}', space=sflag, size = 0x8, scoped, tag = 'scoped memory for tpu_custom_call.1']
    #allocation6 [shape = 'u8[4194304]{0}', space=vmem, size = 0x400000, scoped, tag = 'output window, operand 0']
    %8 = vsyncpa [#allocation4], 0
    %s9 = scalar_lea.sflag [#allocation4], 1
    %10 = vsyncpa %s9, 0
    %11 = vsyncpa [#allocation5], 0
    %s12 = scalar_lea.sflag [#allocation5], 1
    %13 = vsyncpa %s12, 0
    loop: start=0, step=1, limit=6
    $region2: #{tpu_custom_call.1} parent=1 // loop_pre_header
      _
    $region3: #{tpu_custom_call.1} parent=1 // loop_header
      %s15 = sphi 0, %s19
      %p16 = scmp.ge.s32.totalorder %s15, 6
      %s23 = sphi 0, %s23
      %s25 = sphi 0, %s23
      %s26 = sphi 0, %s25
      %s40 = sphi 0, %s26
      %s46 = sphi 0, %s48
      %s49 = sphi 0, %s46
      %s50 = sphi 0, %s49
      %s66 = sphi 0, %s50
      %s72 = sphi 0, %s74
      %s75 = sphi 0, %s72
      %s76 = sphi 0, %s75
      %s92 = sphi 0, %s76
    $region4: #{tpu_custom_call.1} parent=1 // loop_header_branch
      %18 = sbr.rel (%p16) target = $region8
    $region5: #{tpu_custom_call.1} parent=1 // loop_body
      %s20 = ssub.s32 %s15, 1
      %s21 = ssub.s32 %s15, 2
      %s22 = sadd.s32 %s15, 1
      %s24 = sadd.s32 %s23, 1
      %p27 = scmp.eq.s32.totalorder %s15, 3
      %p28 = scmp.ne.s32.totalorder %s23, %s25
      %p29 = scmp.eq.s32.totalorder %s15, 0
      %p30 = por %p28, %p29
      %p31 = scmp.ne.s32.totalorder %s23, %s25
      %p32 = scmp.eq.s32.totalorder %s20, 3
      %p33 = por %p31, %p32
      %p34 = scmp.ne.s32.totalorder %s25, %s26
      %p35 = scmp.eq.s32.totalorder %s20, 0
      %p36 = por %p34, %p35
      %p37 = scmp.ne.s32.totalorder %s25, %s26
      %p38 = scmp.eq.s32.totalorder %s21, 3
      %p39 = por %p37, %p38
      %p41 = scmp.ne.s32.totalorder %s26, %s40
      %p42 = scmp.eq.s32.totalorder %s21, 0
      %p43 = por %p41, %p42
      %s44 = ssub.s32 %s15, %s22
      %p45 = scmp.eq.s32.totalorder %s44, 0
      %s47 = sadd.s32 %s46, 1
      %s48 = scalar_select %p45, %s46, %s47
      %p51 = pneg %p45
      %p52 = scmp.eq.s32.totalorder %s15, 3
      %p53 = por %p51, %p52
      %p54 = scmp.ne.s32.totalorder %s46, %s49
      %p55 = scmp.eq.s32.totalorder %s15, 0
      %p56 = por %p54, %p55
      %p57 = scmp.ne.s32.totalorder %s46, %s49
      %p58 = scmp.eq.s32.totalorder %s20, 3
      %p59 = por %p57, %p58
      %p60 = scmp.ne.s32.totalorder %s49, %s50
      %p61 = scmp.eq.s32.totalorder %s20, 0
      %p62 = por %p60, %p61
      %p63 = scmp.ne.s32.totalorder %s49, %s50
      %p64 = scmp.eq.s32.totalorder %s21, 3
      %p65 = por %p63, %p64
      %p67 = scmp.ne.s32.totalorder %s50, %s66
      %p68 = scmp.eq.s32.totalorder %s21, 0
      %p69 = por %p67, %p68
      %s70 = ssub.s32 %s15, %s22
      %p71 = scmp.eq.s32.totalorder %s70, 0
      %s73 = sadd.s32 %s72, 1
      %s74 = scalar_select %p71, %s72, %s73
      %p77 = pneg %p71
      %p78 = scmp.eq.s32.totalorder %s15, 3
      %p79 = por %p77, %p78
      %p80 = scmp.ne.s32.totalorder %s72, %s75
      %p81 = scmp.eq.s32.totalorder %s15, 0
      %p82 = por %p80, %p81
      %p83 = scmp.ne.s32.totalorder %s72, %s75
      %p84 = scmp.eq.s32.totalorder %s20, 3
      %p85 = por %p83, %p84
      %p86 = scmp.ne.s32.totalorder %s75, %s76
      %p87 = scmp.eq.s32.totalorder %s20, 0
      %p88 = por %p86, %p87
      %p89 = scmp.ne.s32.totalorder %s75, %s76
      %p90 = scmp.eq.s32.totalorder %s21, 3
      %p91 = por %p89, %p90
      %p93 = scmp.ne.s32.totalorder %s76, %s92
      %p94 = scmp.eq.s32.totalorder %s21, 0
      %p95 = por %p93, %p94
      %p96 = scmp.le.s32.totalorder 1, %s15
      %p97 = scmp.lt.s32.totalorder %s15, 5
      %p98 = pnand %p96, %p97
      %p99 = pneg %p98
      // Predicated region
      $region9: #{tpu_custom_call.1} parent=5 // pred_check
        _
      $region10: #{tpu_custom_call.1} parent=5 // pred_check_branch
        %101 = sbr.rel (%p98) target = $region12
      $region11: #{tpu_custom_call.1} parent=5 // pred_region
        %s102 = ssub.s32 %s15, 1
        // Predicated region
        $region13: #{tpu_custom_call.1} parent=11 // pred_check
          %p103 = pneg %p36
        $region14: #{tpu_custom_call.1} parent=11 // pred_check_branch
          %105 = sbr.rel (%p103) target = $region16
        $region15: #{tpu_custom_call.1} parent=11 // pred_region
          _
        $region16: #{tpu_custom_call.1} parent=11 // pred_fallthru
          _
      $region12: #{tpu_custom_call.1} parent=5 // pred_fallthru
        _
      %p106 = scmp.lt.s32.totalorder %s15, 4
      // Predicated region
      $region17: #{tpu_custom_call.1} parent=5 // pred_check
        %p107 = pneg %p106
      $region18: #{tpu_custom_call.1} parent=5 // pred_check_branch
        %109 = sbr.rel (%p107) target = $region20
      $region19: #{tpu_custom_call.1} parent=5 // pred_region
        // Predicated region
        $region21: #{tpu_custom_call.1} parent=19 // pred_check
          %p110 = pneg %p56
        $region22: #{tpu_custom_call.1} parent=19 // pred_check_branch
          %112 = sbr.rel (%p110) target = $region24
        $region23: #{tpu_custom_call.1} parent=19 // pred_region
          %s113 = sand.u32 %s46, 1
          %s114 = scalar_lea.sflag [#allocation4], %s113
          %s115 = sand.u32 %s46, 1
          %s116 = smul.addr %s115, 4096
          %s117 = scalar_lea.vmem [#allocation3], %s116
          %s118 = smul.u32 16, %s15
          %s120 = ssub.s32 65536, 65536
          %121 = vsyncadd %s114, %s120
          %s122 = smul.addr %s118, 32
          %s123 = smul.addr %s122, 128
          %s124 = scalar_lea.hbm %s1, %s123
          %s125 = sshll.u32 %s117, 4
          %s126 = int_to_ptr.vmem [resolvable:$true] %s125
          %131 = dma.hbm_to_vmem [thread:$0]  %s124, 65536, %s126, %s114, 4096, 4096, 256
        $region24: #{tpu_custom_call.1} parent=19 // pred_fallthru
          _
      $region20: #{tpu_custom_call.1} parent=5 // pred_fallthru
        _
      %p132 = scmp.le.s32.totalorder 1, %s15
      %p133 = scmp.lt.s32.totalorder %s15, 5
      %p134 = pnand %p132, %p133
      %p135 = pneg %p134
      // Predicated region
      $region25: #{tpu_custom_call.1} parent=5 // pred_check
        _
      $region26: #{tpu_custom_call.1} parent=5 // pred_check_branch
        %137 = sbr.rel (%p134) target = $region28
      $region27: #{tpu_custom_call.1} parent=5 // pred_region
        %s138 = ssub.s32 %s15, 1
        %s139 = sand.u32 %s49, 1
        %s140 = scalar_lea.sflag [#allocation4], %s139
        %s141 = sand.u32 %s49, 1
        %s142 = smul.addr %s141, 4096
        %s143 = scalar_lea.vmem [#allocation3], %s142
        // Predicated region
        $region29: #{tpu_custom_call.1} parent=27 // pred_check
          %p144 = pneg %p62
        $region30: #{tpu_custom_call.1} parent=27 // pred_check_branch
          %146 = sbr.rel (%p144) target = $region32
        $region31: #{tpu_custom_call.1} parent=27 // pred_region
          %147 = dma.done %s140, 65536
        $region32: #{tpu_custom_call.1} parent=27 // pred_fallthru
          _
        %p148 = pneg %p36
        %p149 = pneg %p33
        %s150 = sand.u32 %s49, 1
        %s151 = scalar_lea.sflag [#allocation4], %s150
        %s152 = sand.u32 %s49, 1
        %s153 = smul.addr %s152, 4096
        %s154 = scalar_lea.vmem [#allocation3], %s153
        %p155 = pneg %p62
        %p156 = pneg %p59
        %p157 = pneg %p88
        %p158 = pneg %p85
        %s159 = sand.u32 %s75, 1
        %s160 = scalar_lea.sflag [#allocation5], %s159
        %s161 = sand.u32 %s75, 1
        %s162 = smul.addr %s161, 4096
        %s163 = scalar_lea.vmem [#allocation6], %s162
        %s164 = smul.u32 16, %s20
        %s165 = smul.u32 16, %s20
        %v166 = vld [vmem:[%s143] sm:$0xff]
        %v167 = vld [vmem:[%s143 + $0x8] sm:$0xff]
        %v168 = vld [vmem:[%s143 + $0x10] sm:$0xff]
        %v169 = vld [vmem:[%s143 + $0x18] sm:$0xff]
        %v170 = vld [vmem:[%s143 + $0x20] sm:$0xff]
        %v171 = vld [vmem:[%s143 + $0x28] sm:$0xff]
        %v172 = vld [vmem:[%s143 + $0x30] sm:$0xff]
        %v173 = vld [vmem:[%s143 + $0x38] sm:$0xff]
        %v174 = vld [vmem:[%s143 + $0x40] sm:$0xff]
        %v175 = vld [vmem:[%s143 + $0x48] sm:$0xff]
        %v176 = vld [vmem:[%s143 + $0x50] sm:$0xff]
        %v177 = vld [vmem:[%s143 + $0x58] sm:$0xff]
        %v178 = vld [vmem:[%s143 + $0x60] sm:$0xff]
        %v179 = vld [vmem:[%s143 + $0x68] sm:$0xff]
        %v180 = vld [vmem:[%s143 + $0x70] sm:$0xff]
        %v181 = vld [vmem:[%s143 + $0x78] sm:$0xff]
        %v182 = vld [vmem:[%s143 + $0x80] sm:$0xff]
        %v183 = vld [vmem:[%s143 + $0x88] sm:$0xff]
        %v184 = vld [vmem:[%s143 + $0x90] sm:$0xff]
        %v185 = vld [vmem:[%s143 + $0x98] sm:$0xff]
        %v186 = vld [vmem:[%s143 + $0xa0] sm:$0xff]
        %v187 = vld [vmem:[%s143 + $0xa8] sm:$0xff]
        %v188 = vld [vmem:[%s143 + $0xb0] sm:$0xff]
        %v189 = vld [vmem:[%s143 + $0xb8] sm:$0xff]
        %v190 = vld [vmem:[%s143 + $0xc0] sm:$0xff]
        %v191 = vld [vmem:[%s143 + $0xc8] sm:$0xff]
        %v192 = vld [vmem:[%s143 + $0xd0] sm:$0xff]
        %v193 = vld [vmem:[%s143 + $0xd8] sm:$0xff]
        %v194 = vld [vmem:[%s143 + $0xe0] sm:$0xff]
        %v195 = vld [vmem:[%s143 + $0xe8] sm:$0xff]
        %v196 = vld [vmem:[%s143 + $0xf0] sm:$0xff]
        %v197 = vld [vmem:[%s143 + $0xf8] sm:$0xff]
        %v198 = vld [vmem:[%s143 + $0x100] sm:$0xff]
        %v199 = vld [vmem:[%s143 + $0x108] sm:$0xff]
        %v200 = vld [vmem:[%s143 + $0x110] sm:$0xff]
        %v201 = vld [vmem:[%s143 + $0x118] sm:$0xff]
        %v202 = vld [vmem:[%s143 + $0x120] sm:$0xff]
        %v203 = vld [vmem:[%s143 + $0x128] sm:$0xff]
        %v204 = vld [vmem:[%s143 + $0x130] sm:$0xff]
        %v205 = vld [vmem:[%s143 + $0x138] sm:$0xff]
        %v206 = vld [vmem:[%s143 + $0x140] sm:$0xff]
        %v207 = vld [vmem:[%s143 + $0x148] sm:$0xff]
        %v208 = vld [vmem:[%s143 + $0x150] sm:$0xff]
        %v209 = vld [vmem:[%s143 + $0x158] sm:$0xff]
        %v210 = vld [vmem:[%s143 + $0x160] sm:$0xff]
        %v211 = vld [vmem:[%s143 + $0x168] sm:$0xff]
        %v212 = vld [vmem:[%s143 + $0x170] sm:$0xff]
        %v213 = vld [vmem:[%s143 + $0x178] sm:$0xff]
        %v214 = vld [vmem:[%s143 + $0x180] sm:$0xff]
        %v215 = vld [vmem:[%s143 + $0x188] sm:$0xff]
        %v216 = vld [vmem:[%s143 + $0x190] sm:$0xff]
        %v217 = vld [vmem:[%s143 + $0x198] sm:$0xff]
        %v218 = vld [vmem:[%s143 + $0x1a0] sm:$0xff]
        %v219 = vld [vmem:[%s143 + $0x1a8] sm:$0xff]
        %v220 = vld [vmem:[%s143 + $0x1b0] sm:$0xff]
        %v221 = vld [vmem:[%s143 + $0x1b8] sm:$0xff]
        %v222 = vld [vmem:[%s143 + $0x1c0] sm:$0xff]
        %v223 = vld [vmem:[%s143 + $0x1c8] sm:$0xff]
        %v224 = vld [vmem:[%s143 + $0x1d0] sm:$0xff]
        %v225 = vld [vmem:[%s143 + $0x1d8] sm:$0xff]
        %v226 = vld [vmem:[%s143 + $0x1e0] sm:$0xff]
        %v227 = vld [vmem:[%s143 + $0x1e8] sm:$0xff]
        %v228 = vld [vmem:[%s143 + $0x1f0] sm:$0xff]
        %v229 = vld [vmem:[%s143 + $0x1f8] sm:$0xff]
        %v230 = vld [vmem:[%s143 + $0x200] sm:$0xff]
        %v231 = vld [vmem:[%s143 + $0x208] sm:$0xff]
        %v232 = vld [vmem:[%s143 + $0x210] sm:$0xff]
        %v233 = vld [vmem:[%s143 + $0x218] sm:$0xff]
        %v234 = vld [vmem:[%s143 + $0x220] sm:$0xff]
        %v235 = vld [vmem:[%s143 + $0x228] sm:$0xff]
        %v236 = vld [vmem:[%s143 + $0x230] sm:$0xff]
        %v237 = vld [vmem:[%s143 + $0x238] sm:$0xff]
        %v238 = vld [vmem:[%s143 + $0x240] sm:$0xff]
        %v239 = vld [vmem:[%s143 + $0x248] sm:$0xff]
        %v240 = vld [vmem:[%s143 + $0x250] sm:$0xff]
        %v241 = vld [vmem:[%s143 + $0x258] sm:$0xff]
        %v242 = vld [vmem:[%s143 + $0x260] sm:$0xff]
        %v243 = vld [vmem:[%s143 + $0x268] sm:$0xff]
        %v244 = vld [vmem:[%s143 + $0x270] sm:$0xff]
        %v245 = vld [vmem:[%s143 + $0x278] sm:$0xff]
        %v246 = vld [vmem:[%s143 + $0x280] sm:$0xff]
        %v247 = vld [vmem:[%s143 + $0x288] sm:$0xff]
        %v248 = vld [vmem:[%s143 + $0x290] sm:$0xff]
        %v249 = vld [vmem:[%s143 + $0x298] sm:$0xff]
        %v250 = vld [vmem:[%s143 + $0x2a0] sm:$0xff]
        %v251 = vld [vmem:[%s143 + $0x2a8] sm:$0xff]
        %v252 = vld [vmem:[%s143 + $0x2b0] sm:$0xff]
        %v253 = vld [vmem:[%s143 + $0x2b8] sm:$0xff]
        %v254 = vld [vmem:[%s143 + $0x2c0] sm:$0xff]
        %v255 = vld [vmem:[%s143 + $0x2c8] sm:$0xff]
        %v256 = vld [vmem:[%s143 + $0x2d0] sm:$0xff]
        %v257 = vld [vmem:[%s143 + $0x2d8] sm:$0xff]
        %v258 = vld [vmem:[%s143 + $0x2e0] sm:$0xff]
        %v259 = vld [vmem:[%s143 + $0x2e8] sm:$0xff]
        %v260 = vld [vmem:[%s143 + $0x2f0] sm:$0xff]
        %v261 = vld [vmem:[%s143 + $0x2f8] sm:$0xff]
        %v262 = vld [vmem:[%s143 + $0x300] sm:$0xff]
        %v263 = vld [vmem:[%s143 + $0x308] sm:$0xff]
        %v264 = vld [vmem:[%s143 + $0x310] sm:$0xff]
        %v265 = vld [vmem:[%s143 + $0x318] sm:$0xff]
        %v266 = vld [vmem:[%s143 + $0x320] sm:$0xff]
        %v267 = vld [vmem:[%s143 + $0x328] sm:$0xff]
        %v268 = vld [vmem:[%s143 + $0x330] sm:$0xff]
        %v269 = vld [vmem:[%s143 + $0x338] sm:$0xff]
        %v270 = vld [vmem:[%s143 + $0x340] sm:$0xff]
        %v271 = vld [vmem:[%s143 + $0x348] sm:$0xff]
        %v272 = vld [vmem:[%s143 + $0x350] sm:$0xff]
        %v273 = vld [vmem:[%s143 + $0x358] sm:$0xff]
        %v274 = vld [vmem:[%s143 + $0x360] sm:$0xff]
        %v275 = vld [vmem:[%s143 + $0x368] sm:$0xff]
        %v276 = vld [vmem:[%s143 + $0x370] sm:$0xff]
        %v277 = vld [vmem:[%s143 + $0x378] sm:$0xff]
        %v278 = vld [vmem:[%s143 + $0x380] sm:$0xff]
        %v279 = vld [vmem:[%s143 + $0x388] sm:$0xff]
        %v280 = vld [vmem:[%s143 + $0x390] sm:$0xff]
        %v281 = vld [vmem:[%s143 + $0x398] sm:$0xff]
        %v282 = vld [vmem:[%s143 + $0x3a0] sm:$0xff]
        %v283 = vld [vmem:[%s143 + $0x3a8] sm:$0xff]
        %v284 = vld [vmem:[%s143 + $0x3b0] sm:$0xff]
        %v285 = vld [vmem:[%s143 + $0x3b8] sm:$0xff]
        %v286 = vld [vmem:[%s143 + $0x3c0] sm:$0xff]
        %v287 = vld [vmem:[%s143 + $0x3c8] sm:$0xff]
        %v288 = vld [vmem:[%s143 + $0x3d0] sm:$0xff]
        %v289 = vld [vmem:[%s143 + $0x3d8] sm:$0xff]
        %v290 = vld [vmem:[%s143 + $0x3e0] sm:$0xff]
        %v291 = vld [vmem:[%s143 + $0x3e8] sm:$0xff]
        %v292 = vld [vmem:[%s143 + $0x3f0] sm:$0xff]
        %v293 = vld [vmem:[%s143 + $0x3f8] sm:$0xff]
        %v294 = vld [vmem:[%s143 + $0x400] sm:$0xff]
        %v295 = vld [vmem:[%s143 + $0x408] sm:$0xff]
        %v296 = vld [vmem:[%s143 + $0x410] sm:$0xff]
        %v297 = vld [vmem:[%s143 + $0x418] sm:$0xff]
        %v298 = vld [vmem:[%s143 + $0x420] sm:$0xff]
        %v299 = vld [vmem:[%s143 + $0x428] sm:$0xff]
        %v300 = vld [vmem:[%s143 + $0x430] sm:$0xff]
        %v301 = vld [vmem:[%s143 + $0x438] sm:$0xff]
        %v302 = vld [vmem:[%s143 + $0x440] sm:$0xff]
        %v303 = vld [vmem:[%s143 + $0x448] sm:$0xff]
        %v304 = vld [vmem:[%s143 + $0x450] sm:$0xff]
        %v305 = vld [vmem:[%s143 + $0x458] sm:$0xff]
        %v306 = vld [vmem:[%s143 + $0x460] sm:$0xff]
        %v307 = vld [vmem:[%s143 + $0x468] sm:$0xff]
        %v308 = vld [vmem:[%s143 + $0x470] sm:$0xff]
        %v309 = vld [vmem:[%s143 + $0x478] sm:$0xff]
        %v310 = vld [vmem:[%s143 + $0x480] sm:$0xff]
        %v311 = vld [vmem:[%s143 + $0x488] sm:$0xff]
        %v312 = vld [vmem:[%s143 + $0x490] sm:$0xff]
        %v313 = vld [vmem:[%s143 + $0x498] sm:$0xff]
        %v314 = vld [vmem:[%s143 + $0x4a0] sm:$0xff]
        %v315 = vld [vmem:[%s143 + $0x4a8] sm:$0xff]
        %v316 = vld [vmem:[%s143 + $0x4b0] sm:$0xff]
        %v317 = vld [vmem:[%s143 + $0x4b8] sm:$0xff]
        %v318 = vld [vmem:[%s143 + $0x4c0] sm:$0xff]
        %v319 = vld [vmem:[%s143 + $0x4c8] sm:$0xff]
        %v320 = vld [vmem:[%s143 + $0x4d0] sm:$0xff]
        %v321 = vld [vmem:[%s143 + $0x4d8] sm:$0xff]
        %v322 = vld [vmem:[%s143 + $0x4e0] sm:$0xff]
        %v323 = vld [vmem:[%s143 + $0x4e8] sm:$0xff]
        %v324 = vld [vmem:[%s143 + $0x4f0] sm:$0xff]
        %v325 = vld [vmem:[%s143 + $0x4f8] sm:$0xff]
        %v326 = vld [vmem:[%s143 + $0x500] sm:$0xff]
        %v327 = vld [vmem:[%s143 + $0x508] sm:$0xff]
        %v328 = vld [vmem:[%s143 + $0x510] sm:$0xff]
        %v329 = vld [vmem:[%s143 + $0x518] sm:$0xff]
        %v330 = vld [vmem:[%s143 + $0x520] sm:$0xff]
        %v331 = vld [vmem:[%s143 + $0x528] sm:$0xff]
        %v332 = vld [vmem:[%s143 + $0x530] sm:$0xff]
        %v333 = vld [vmem:[%s143 + $0x538] sm:$0xff]
        %v334 = vld [vmem:[%s143 + $0x540] sm:$0xff]
        %v335 = vld [vmem:[%s143 + $0x548] sm:$0xff]
        %v336 = vld [vmem:[%s143 + $0x550] sm:$0xff]
        %v337 = vld [vmem:[%s143 + $0x558] sm:$0xff]
        %v338 = vld [vmem:[%s143 + $0x560] sm:$0xff]
        %v339 = vld [vmem:[%s143 + $0x568] sm:$0xff]
        %v340 = vld [vmem:[%s143 + $0x570] sm:$0xff]
        %v341 = vld [vmem:[%s143 + $0x578] sm:$0xff]
        %v342 = vld [vmem:[%s143 + $0x580] sm:$0xff]
        %v343 = vld [vmem:[%s143 + $0x588] sm:$0xff]
        %v344 = vld [vmem:[%s143 + $0x590] sm:$0xff]
        %v345 = vld [vmem:[%s143 + $0x598] sm:$0xff]
        %v346 = vld [vmem:[%s143 + $0x5a0] sm:$0xff]
        %v347 = vld [vmem:[%s143 + $0x5a8] sm:$0xff]
        %v348 = vld [vmem:[%s143 + $0x5b0] sm:$0xff]
        %v349 = vld [vmem:[%s143 + $0x5b8] sm:$0xff]
        %v350 = vld [vmem:[%s143 + $0x5c0] sm:$0xff]
        %v351 = vld [vmem:[%s143 + $0x5c8] sm:$0xff]
        %v352 = vld [vmem:[%s143 + $0x5d0] sm:$0xff]
        %v353 = vld [vmem:[%s143 + $0x5d8] sm:$0xff]
        %v354 = vld [vmem:[%s143 + $0x5e0] sm:$0xff]
        %v355 = vld [vmem:[%s143 + $0x5e8] sm:$0xff]
        %v356 = vld [vmem:[%s143 + $0x5f0] sm:$0xff]
        %v357 = vld [vmem:[%s143 + $0x5f8] sm:$0xff]
        %v358 = vld [vmem:[%s143 + $0x600] sm:$0xff]
        %v359 = vld [vmem:[%s143 + $0x608] sm:$0xff]
        %v360 = vld [vmem:[%s143 + $0x610] sm:$0xff]
        %v361 = vld [vmem:[%s143 + $0x618] sm:$0xff]
        %v362 = vld [vmem:[%s143 + $0x620] sm:$0xff]
        %v363 = vld [vmem:[%s143 + $0x628] sm:$0xff]
        %v364 = vld [vmem:[%s143 + $0x630] sm:$0xff]
        %v365 = vld [vmem:[%s143 + $0x638] sm:$0xff]
        %v366 = vld [vmem:[%s143 + $0x640] sm:$0xff]
        %v367 = vld [vmem:[%s143 + $0x648] sm:$0xff]
        %v368 = vld [vmem:[%s143 + $0x650] sm:$0xff]
        %v369 = vld [vmem:[%s143 + $0x658] sm:$0xff]
        %v370 = vld [vmem:[%s143 + $0x660] sm:$0xff]
        %v371 = vld [vmem:[%s143 + $0x668] sm:$0xff]
        %v372 = vld [vmem:[%s143 + $0x670] sm:$0xff]
        %v373 = vld [vmem:[%s143 + $0x678] sm:$0xff]
        %v374 = vld [vmem:[%s143 + $0x680] sm:$0xff]
        %v375 = vld [vmem:[%s143 + $0x688] sm:$0xff]
        %v376 = vld [vmem:[%s143 + $0x690] sm:$0xff]
        %v377 = vld [vmem:[%s143 + $0x698] sm:$0xff]
        %v378 = vld [vmem:[%s143 + $0x6a0] sm:$0xff]
        %v379 = vld [vmem:[%s143 + $0x6a8] sm:$0xff]
        %v380 = vld [vmem:[%s143 + $0x6b0] sm:$0xff]
        %v381 = vld [vmem:[%s143 + $0x6b8] sm:$0xff]
        %v382 = vld [vmem:[%s143 + $0x6c0] sm:$0xff]
        %v383 = vld [vmem:[%s143 + $0x6c8] sm:$0xff]
        %v384 = vld [vmem:[%s143 + $0x6d0] sm:$0xff]
        %v385 = vld [vmem:[%s143 + $0x6d8] sm:$0xff]
        %v386 = vld [vmem:[%s143 + $0x6e0] sm:$0xff]
        %v387 = vld [vmem:[%s143 + $0x6e8] sm:$0xff]
        %v388 = vld [vmem:[%s143 + $0x6f0] sm:$0xff]
        %v389 = vld [vmem:[%s143 + $0x6f8] sm:$0xff]
        %v390 = vld [vmem:[%s143 + $0x700] sm:$0xff]
        %v391 = vld [vmem:[%s143 + $0x708] sm:$0xff]
        %v392 = vld [vmem:[%s143 + $0x710] sm:$0xff]
        %v393 = vld [vmem:[%s143 + $0x718] sm:$0xff]
        %v394 = vld [vmem:[%s143 + $0x720] sm:$0xff]
        %v395 = vld [vmem:[%s143 + $0x728] sm:$0xff]
        %v396 = vld [vmem:[%s143 + $0x730] sm:$0xff]
        %v397 = vld [vmem:[%s143 + $0x738] sm:$0xff]
        %v398 = vld [vmem:[%s143 + $0x740] sm:$0xff]
        %v399 = vld [vmem:[%s143 + $0x748] sm:$0xff]
        %v400 = vld [vmem:[%s143 + $0x750] sm:$0xff]
        %v401 = vld [vmem:[%s143 + $0x758] sm:$0xff]
        %v402 = vld [vmem:[%s143 + $0x760] sm:$0xff]
        %v403 = vld [vmem:[%s143 + $0x768] sm:$0xff]
        %v404 = vld [vmem:[%s143 + $0x770] sm:$0xff]
        %v405 = vld [vmem:[%s143 + $0x778] sm:$0xff]
        %v406 = vld [vmem:[%s143 + $0x780] sm:$0xff]
        %v407 = vld [vmem:[%s143 + $0x788] sm:$0xff]
        %v408 = vld [vmem:[%s143 + $0x790] sm:$0xff]
        %v409 = vld [vmem:[%s143 + $0x798] sm:$0xff]
        %v410 = vld [vmem:[%s143 + $0x7a0] sm:$0xff]
        %v411 = vld [vmem:[%s143 + $0x7a8] sm:$0xff]
        %v412 = vld [vmem:[%s143 + $0x7b0] sm:$0xff]
        %v413 = vld [vmem:[%s143 + $0x7b8] sm:$0xff]
        %v414 = vld [vmem:[%s143 + $0x7c0] sm:$0xff]
        %v415 = vld [vmem:[%s143 + $0x7c8] sm:$0xff]
        %v416 = vld [vmem:[%s143 + $0x7d0] sm:$0xff]
        %v417 = vld [vmem:[%s143 + $0x7d8] sm:$0xff]
        %v418 = vld [vmem:[%s143 + $0x7e0] sm:$0xff]
        %v419 = vld [vmem:[%s143 + $0x7e8] sm:$0xff]
        %v420 = vld [vmem:[%s143 + $0x7f0] sm:$0xff]
        %v421 = vld [vmem:[%s143 + $0x7f8] sm:$0xff]
        %v422 = vld [vmem:[%s143 + $0x800] sm:$0xff]
        %v423 = vld [vmem:[%s143 + $0x808] sm:$0xff]
        %v424 = vld [vmem:[%s143 + $0x810] sm:$0xff]
        %v425 = vld [vmem:[%s143 + $0x818] sm:$0xff]
        %v426 = vld [vmem:[%s143 + $0x820] sm:$0xff]
        %v427 = vld [vmem:[%s143 + $0x828] sm:$0xff]
        %v428 = vld [vmem:[%s143 + $0x830] sm:$0xff]
        %v429 = vld [vmem:[%s143 + $0x838] sm:$0xff]
        %v430 = vld [vmem:[%s143 + $0x840] sm:$0xff]
        %v431 = vld [vmem:[%s143 + $0x848] sm:$0xff]
        %v432 = vld [vmem:[%s143 + $0x850] sm:$0xff]
        %v433 = vld [vmem:[%s143 + $0x858] sm:$0xff]
        %v434 = vld [vmem:[%s143 + $0x860] sm:$0xff]
        %v435 = vld [vmem:[%s143 + $0x868] sm:$0xff]
        %v436 = vld [vmem:[%s143 + $0x870] sm:$0xff]
        %v437 = vld [vmem:[%s143 + $0x878] sm:$0xff]
        %v438 = vld [vmem:[%s143 + $0x880] sm:$0xff]
        %v439 = vld [vmem:[%s143 + $0x888] sm:$0xff]
        %v440 = vld [vmem:[%s143 + $0x890] sm:$0xff]
        %v441 = vld [vmem:[%s143 + $0x898] sm:$0xff]
        %v442 = vld [vmem:[%s143 + $0x8a0] sm:$0xff]
        %v443 = vld [vmem:[%s143 + $0x8a8] sm:$0xff]
        %v444 = vld [vmem:[%s143 + $0x8b0] sm:$0xff]
        %v445 = vld [vmem:[%s143 + $0x8b8] sm:$0xff]
        %v446 = vld [vmem:[%s143 + $0x8c0] sm:$0xff]
        %v447 = vld [vmem:[%s143 + $0x8c8] sm:$0xff]
        %v448 = vld [vmem:[%s143 + $0x8d0] sm:$0xff]
        %v449 = vld [vmem:[%s143 + $0x8d8] sm:$0xff]
        %v450 = vld [vmem:[%s143 + $0x8e0] sm:$0xff]
        %v451 = vld [vmem:[%s143 + $0x8e8] sm:$0xff]
        %v452 = vld [vmem:[%s143 + $0x8f0] sm:$0xff]
        %v453 = vld [vmem:[%s143 + $0x8f8] sm:$0xff]
        %v454 = vld [vmem:[%s143 + $0x900] sm:$0xff]
        %v455 = vld [vmem:[%s143 + $0x908] sm:$0xff]
        %v456 = vld [vmem:[%s143 + $0x910] sm:$0xff]
        %v457 = vld [vmem:[%s143 + $0x918] sm:$0xff]
        %v458 = vld [vmem:[%s143 + $0x920] sm:$0xff]
        %v459 = vld [vmem:[%s143 + $0x928] sm:$0xff]
        %v460 = vld [vmem:[%s143 + $0x930] sm:$0xff]
        %v461 = vld [vmem:[%s143 + $0x938] sm:$0xff]
        %v462 = vld [vmem:[%s143 + $0x940] sm:$0xff]
        %v463 = vld [vmem:[%s143 + $0x948] sm:$0xff]
        %v464 = vld [vmem:[%s143 + $0x950] sm:$0xff]
        %v465 = vld [vmem:[%s143 + $0x958] sm:$0xff]
        %v466 = vld [vmem:[%s143 + $0x960] sm:$0xff]
        %v467 = vld [vmem:[%s143 + $0x968] sm:$0xff]
        %v468 = vld [vmem:[%s143 + $0x970] sm:$0xff]
        %v469 = vld [vmem:[%s143 + $0x978] sm:$0xff]
        %v470 = vld [vmem:[%s143 + $0x980] sm:$0xff]
        %v471 = vld [vmem:[%s143 + $0x988] sm:$0xff]
        %v472 = vld [vmem:[%s143 + $0x990] sm:$0xff]
        %v473 = vld [vmem:[%s143 + $0x998] sm:$0xff]
        %v474 = vld [vmem:[%s143 + $0x9a0] sm:$0xff]
        %v475 = vld [vmem:[%s143 + $0x9a8] sm:$0xff]
        %v476 = vld [vmem:[%s143 + $0x9b0] sm:$0xff]
        %v477 = vld [vmem:[%s143 + $0x9b8] sm:$0xff]
        %v478 = vld [vmem:[%s143 + $0x9c0] sm:$0xff]
        %v479 = vld [vmem:[%s143 + $0x9c8] sm:$0xff]
        %v480 = vld [vmem:[%s143 + $0x9d0] sm:$0xff]
        %v481 = vld [vmem:[%s143 + $0x9d8] sm:$0xff]
        %v482 = vld [vmem:[%s143 + $0x9e0] sm:$0xff]
        %v483 = vld [vmem:[%s143 + $0x9e8] sm:$0xff]
        %v484 = vld [vmem:[%s143 + $0x9f0] sm:$0xff]
        %v485 = vld [vmem:[%s143 + $0x9f8] sm:$0xff]
        %v486 = vld [vmem:[%s143 + $0xa00] sm:$0xff]
        %v487 = vld [vmem:[%s143 + $0xa08] sm:$0xff]
        %v488 = vld [vmem:[%s143 + $0xa10] sm:$0xff]
        %v489 = vld [vmem:[%s143 + $0xa18] sm:$0xff]
        %v490 = vld [vmem:[%s143 + $0xa20] sm:$0xff]
        %v491 = vld [vmem:[%s143 + $0xa28] sm:$0xff]
        %v492 = vld [vmem:[%s143 + $0xa30] sm:$0xff]
        %v493 = vld [vmem:[%s143 + $0xa38] sm:$0xff]
        %v494 = vld [vmem:[%s143 + $0xa40] sm:$0xff]
        %v495 = vld [vmem:[%s143 + $0xa48] sm:$0xff]
        %v496 = vld [vmem:[%s143 + $0xa50] sm:$0xff]
        %v497 = vld [vmem:[%s143 + $0xa58] sm:$0xff]
        %v498 = vld [vmem:[%s143 + $0xa60] sm:$0xff]
        %v499 = vld [vmem:[%s143 + $0xa68] sm:$0xff]
        %v500 = vld [vmem:[%s143 + $0xa70] sm:$0xff]
        %v501 = vld [vmem:[%s143 + $0xa78] sm:$0xff]
        %v502 = vld [vmem:[%s143 + $0xa80] sm:$0xff]
        %v503 = vld [vmem:[%s143 + $0xa88] sm:$0xff]
        %v504 = vld [vmem:[%s143 + $0xa90] sm:$0xff]
        %v505 = vld [vmem:[%s143 + $0xa98] sm:$0xff]
        %v506 = vld [vmem:[%s143 + $0xaa0] sm:$0xff]
        %v507 = vld [vmem:[%s143 + $0xaa8] sm:$0xff]
        %v508 = vld [vmem:[%s143 + $0xab0] sm:$0xff]
        %v509 = vld [vmem:[%s143 + $0xab8] sm:$0xff]
        %v510 = vld [vmem:[%s143 + $0xac0] sm:$0xff]
        %v511 = vld [vmem:[%s143 + $0xac8] sm:$0xff]
        %v512 = vld [vmem:[%s143 + $0xad0] sm:$0xff]
        %v513 = vld [vmem:[%s143 + $0xad8] sm:$0xff]
        %v514 = vld [vmem:[%s143 + $0xae0] sm:$0xff]
        %v515 = vld [vmem:[%s143 + $0xae8] sm:$0xff]
        %v516 = vld [vmem:[%s143 + $0xaf0] sm:$0xff]
        %v517 = vld [vmem:[%s143 + $0xaf8] sm:$0xff]
        %v518 = vld [vmem:[%s143 + $0xb00] sm:$0xff]
        %v519 = vld [vmem:[%s143 + $0xb08] sm:$0xff]
        %v520 = vld [vmem:[%s143 + $0xb10] sm:$0xff]
        %v521 = vld [vmem:[%s143 + $0xb18] sm:$0xff]
        %v522 = vld [vmem:[%s143 + $0xb20] sm:$0xff]
        %v523 = vld [vmem:[%s143 + $0xb28] sm:$0xff]
        %v524 = vld [vmem:[%s143 + $0xb30] sm:$0xff]
        %v525 = vld [vmem:[%s143 + $0xb38] sm:$0xff]
        %v526 = vld [vmem:[%s143 + $0xb40] sm:$0xff]
        %v527 = vld [vmem:[%s143 + $0xb48] sm:$0xff]
        %v528 = vld [vmem:[%s143 + $0xb50] sm:$0xff]
        %v529 = vld [vmem:[%s143 + $0xb58] sm:$0xff]
        %v530 = vld [vmem:[%s143 + $0xb60] sm:$0xff]
        %v531 = vld [vmem:[%s143 + $0xb68] sm:$0xff]
        %v532 = vld [vmem:[%s143 + $0xb70] sm:$0xff]
        %v533 = vld [vmem:[%s143 + $0xb78] sm:$0xff]
        %v534 = vld [vmem:[%s143 + $0xb80] sm:$0xff]
        %v535 = vld [vmem:[%s143 + $0xb88] sm:$0xff]
        %v536 = vld [vmem:[%s143 + $0xb90] sm:$0xff]
        %v537 = vld [vmem:[%s143 + $0xb98] sm:$0xff]
        %v538 = vld [vmem:[%s143 + $0xba0] sm:$0xff]
        %v539 = vld [vmem:[%s143 + $0xba8] sm:$0xff]
        %v540 = vld [vmem:[%s143 + $0xbb0] sm:$0xff]
        %v541 = vld [vmem:[%s143 + $0xbb8] sm:$0xff]
        %v542 = vld [vmem:[%s143 + $0xbc0] sm:$0xff]
        %v543 = vld [vmem:[%s143 + $0xbc8] sm:$0xff]
        %v544 = vld [vmem:[%s143 + $0xbd0] sm:$0xff]
        %v545 = vld [vmem:[%s143 + $0xbd8] sm:$0xff]
        %v546 = vld [vmem:[%s143 + $0xbe0] sm:$0xff]
        %v547 = vld [vmem:[%s143 + $0xbe8] sm:$0xff]
        %v548 = vld [vmem:[%s143 + $0xbf0] sm:$0xff]
        %v549 = vld [vmem:[%s143 + $0xbf8] sm:$0xff]
        %v550 = vld [vmem:[%s143 + $0xc00] sm:$0xff]
        %v551 = vld [vmem:[%s143 + $0xc08] sm:$0xff]
        %v552 = vld [vmem:[%s143 + $0xc10] sm:$0xff]
        %v553 = vld [vmem:[%s143 + $0xc18] sm:$0xff]
        %v554 = vld [vmem:[%s143 + $0xc20] sm:$0xff]
        %v555 = vld [vmem:[%s143 + $0xc28] sm:$0xff]
        %v556 = vld [vmem:[%s143 + $0xc30] sm:$0xff]
        %v557 = vld [vmem:[%s143 + $0xc38] sm:$0xff]
        %v558 = vld [vmem:[%s143 + $0xc40] sm:$0xff]
        %v559 = vld [vmem:[%s143 + $0xc48] sm:$0xff]
        %v560 = vld [vmem:[%s143 + $0xc50] sm:$0xff]
        %v561 = vld [vmem:[%s143 + $0xc58] sm:$0xff]
        %v562 = vld [vmem:[%s143 + $0xc60] sm:$0xff]
        %v563 = vld [vmem:[%s143 + $0xc68] sm:$0xff]
        %v564 = vld [vmem:[%s143 + $0xc70] sm:$0xff]
        %v565 = vld [vmem:[%s143 + $0xc78] sm:$0xff]
        %v566 = vld [vmem:[%s143 + $0xc80] sm:$0xff]
        %v567 = vld [vmem:[%s143 + $0xc88] sm:$0xff]
        %v568 = vld [vmem:[%s143 + $0xc90] sm:$0xff]
        %v569 = vld [vmem:[%s143 + $0xc98] sm:$0xff]
        %v570 = vld [vmem:[%s143 + $0xca0] sm:$0xff]
        %v571 = vld [vmem:[%s143 + $0xca8] sm:$0xff]
        %v572 = vld [vmem:[%s143 + $0xcb0] sm:$0xff]
        %v573 = vld [vmem:[%s143 + $0xcb8] sm:$0xff]
        %v574 = vld [vmem:[%s143 + $0xcc0] sm:$0xff]
        %v575 = vld [vmem:[%s143 + $0xcc8] sm:$0xff]
        %v576 = vld [vmem:[%s143 + $0xcd0] sm:$0xff]
        %v577 = vld [vmem:[%s143 + $0xcd8] sm:$0xff]
        %v578 = vld [vmem:[%s143 + $0xce0] sm:$0xff]
        %v579 = vld [vmem:[%s143 + $0xce8] sm:$0xff]
        %v580 = vld [vmem:[%s143 + $0xcf0] sm:$0xff]
        %v581 = vld [vmem:[%s143 + $0xcf8] sm:$0xff]
        %v582 = vld [vmem:[%s143 + $0xd00] sm:$0xff]
        %v583 = vld [vmem:[%s143 + $0xd08] sm:$0xff]
        %v584 = vld [vmem:[%s143 + $0xd10] sm:$0xff]
        %v585 = vld [vmem:[%s143 + $0xd18] sm:$0xff]
        %v586 = vld [vmem:[%s143 + $0xd20] sm:$0xff]
        %v587 = vld [vmem:[%s143 + $0xd28] sm:$0xff]
        %v588 = vld [vmem:[%s143 + $0xd30] sm:$0xff]
        %v589 = vld [vmem:[%s143 + $0xd38] sm:$0xff]
        %v590 = vld [vmem:[%s143 + $0xd40] sm:$0xff]
        %v591 = vld [vmem:[%s143 + $0xd48] sm:$0xff]
        %v592 = vld [vmem:[%s143 + $0xd50] sm:$0xff]
        %v593 = vld [vmem:[%s143 + $0xd58] sm:$0xff]
        %v594 = vld [vmem:[%s143 + $0xd60] sm:$0xff]
        %v595 = vld [vmem:[%s143 + $0xd68] sm:$0xff]
        %v596 = vld [vmem:[%s143 + $0xd70] sm:$0xff]
        %v597 = vld [vmem:[%s143 + $0xd78] sm:$0xff]
        %v598 = vld [vmem:[%s143 + $0xd80] sm:$0xff]
        %v599 = vld [vmem:[%s143 + $0xd88] sm:$0xff]
        %v600 = vld [vmem:[%s143 + $0xd90] sm:$0xff]
        %v601 = vld [vmem:[%s143 + $0xd98] sm:$0xff]
        %v602 = vld [vmem:[%s143 + $0xda0] sm:$0xff]
        %v603 = vld [vmem:[%s143 + $0xda8] sm:$0xff]
        %v604 = vld [vmem:[%s143 + $0xdb0] sm:$0xff]
        %v605 = vld [vmem:[%s143 + $0xdb8] sm:$0xff]
        %v606 = vld [vmem:[%s143 + $0xdc0] sm:$0xff]
        %v607 = vld [vmem:[%s143 + $0xdc8] sm:$0xff]
        %v608 = vld [vmem:[%s143 + $0xdd0] sm:$0xff]
        %v609 = vld [vmem:[%s143 + $0xdd8] sm:$0xff]
        %v610 = vld [vmem:[%s143 + $0xde0] sm:$0xff]
        %v611 = vld [vmem:[%s143 + $0xde8] sm:$0xff]
        %v612 = vld [vmem:[%s143 + $0xdf0] sm:$0xff]
        %v613 = vld [vmem:[%s143 + $0xdf8] sm:$0xff]
        %v614 = vld [vmem:[%s143 + $0xe00] sm:$0xff]
        %v615 = vld [vmem:[%s143 + $0xe08] sm:$0xff]
        %v616 = vld [vmem:[%s143 + $0xe10] sm:$0xff]
        %v617 = vld [vmem:[%s143 + $0xe18] sm:$0xff]
        %v618 = vld [vmem:[%s143 + $0xe20] sm:$0xff]
        %v619 = vld [vmem:[%s143 + $0xe28] sm:$0xff]
        %v620 = vld [vmem:[%s143 + $0xe30] sm:$0xff]
        %v621 = vld [vmem:[%s143 + $0xe38] sm:$0xff]
        %v622 = vld [vmem:[%s143 + $0xe40] sm:$0xff]
        %v623 = vld [vmem:[%s143 + $0xe48] sm:$0xff]
        %v624 = vld [vmem:[%s143 + $0xe50] sm:$0xff]
        %v625 = vld [vmem:[%s143 + $0xe58] sm:$0xff]
        %v626 = vld [vmem:[%s143 + $0xe60] sm:$0xff]
        %v627 = vld [vmem:[%s143 + $0xe68] sm:$0xff]
        %v628 = vld [vmem:[%s143 + $0xe70] sm:$0xff]
        %v629 = vld [vmem:[%s143 + $0xe78] sm:$0xff]
        %v630 = vld [vmem:[%s143 + $0xe80] sm:$0xff]
        %v631 = vld [vmem:[%s143 + $0xe88] sm:$0xff]
        %v632 = vld [vmem:[%s143 + $0xe90] sm:$0xff]
        %v633 = vld [vmem:[%s143 + $0xe98] sm:$0xff]
        %v634 = vld [vmem:[%s143 + $0xea0] sm:$0xff]
        %v635 = vld [vmem:[%s143 + $0xea8] sm:$0xff]
        %v636 = vld [vmem:[%s143 + $0xeb0] sm:$0xff]
        %v637 = vld [vmem:[%s143 + $0xeb8] sm:$0xff]
        %v638 = vld [vmem:[%s143 + $0xec0] sm:$0xff]
        %v639 = vld [vmem:[%s143 + $0xec8] sm:$0xff]
        %v640 = vld [vmem:[%s143 + $0xed0] sm:$0xff]
        %v641 = vld [vmem:[%s143 + $0xed8] sm:$0xff]
        %v642 = vld [vmem:[%s143 + $0xee0] sm:$0xff]
        %v643 = vld [vmem:[%s143 + $0xee8] sm:$0xff]
        %v644 = vld [vmem:[%s143 + $0xef0] sm:$0xff]
        %v645 = vld [vmem:[%s143 + $0xef8] sm:$0xff]
        %v646 = vld [vmem:[%s143 + $0xf00] sm:$0xff]
        %v647 = vld [vmem:[%s143 + $0xf08] sm:$0xff]
        %v648 = vld [vmem:[%s143 + $0xf10] sm:$0xff]
        %v649 = vld [vmem:[%s143 + $0xf18] sm:$0xff]
        %v650 = vld [vmem:[%s143 + $0xf20] sm:$0xff]
        %v651 = vld [vmem:[%s143 + $0xf28] sm:$0xff]
        %v652 = vld [vmem:[%s143 + $0xf30] sm:$0xff]
        %v653 = vld [vmem:[%s143 + $0xf38] sm:$0xff]
        %v654 = vld [vmem:[%s143 + $0xf40] sm:$0xff]
        %v655 = vld [vmem:[%s143 + $0xf48] sm:$0xff]
        %v656 = vld [vmem:[%s143 + $0xf50] sm:$0xff]
        %v657 = vld [vmem:[%s143 + $0xf58] sm:$0xff]
        %v658 = vld [vmem:[%s143 + $0xf60] sm:$0xff]
        %v659 = vld [vmem:[%s143 + $0xf68] sm:$0xff]
        %v660 = vld [vmem:[%s143 + $0xf70] sm:$0xff]
        %v661 = vld [vmem:[%s143 + $0xf78] sm:$0xff]
        %v662 = vld [vmem:[%s143 + $0xf80] sm:$0xff]
        %v663 = vld [vmem:[%s143 + $0xf88] sm:$0xff]
        %v664 = vld [vmem:[%s143 + $0xf90] sm:$0xff]
        %v665 = vld [vmem:[%s143 + $0xf98] sm:$0xff]
        %v666 = vld [vmem:[%s143 + $0xfa0] sm:$0xff]
        %v667 = vld [vmem:[%s143 + $0xfa8] sm:$0xff]
        %v668 = vld [vmem:[%s143 + $0xfb0] sm:$0xff]
        %v669 = vld [vmem:[%s143 + $0xfb8] sm:$0xff]
        %v670 = vld [vmem:[%s143 + $0xfc0] sm:$0xff]
        %v671 = vld [vmem:[%s143 + $0xfc8] sm:$0xff]
        %v672 = vld [vmem:[%s143 + $0xfd0] sm:$0xff]
        %v673 = vld [vmem:[%s143 + $0xfd8] sm:$0xff]
        %v674 = vld [vmem:[%s143 + $0xfe0] sm:$0xff]
        %v675 = vld [vmem:[%s143 + $0xfe8] sm:$0xff]
        %v676 = vld [vmem:[%s143 + $0xff0] sm:$0xff]
        %v677 = vld [vmem:[%s143 + $0xff8] sm:$0xff]
        %s678 = sld [smem:[#allocation2]]
        %v679 = vstv %s678
        %v680 = vadd.f32 %v166, %v679
        %v681 = vadd.f32 %v167, %v679
        %v682 = vadd.f32 %v168, %v679
        %v683 = vadd.f32 %v169, %v679
        %v684 = vadd.f32 %v170, %v679
        %v685 = vadd.f32 %v171, %v679
        %v686 = vadd.f32 %v172, %v679
        %v687 = vadd.f32 %v173, %v679
        %v688 = vadd.f32 %v174, %v679
        %v689 = vadd.f32 %v175, %v679
        %v690 = vadd.f32 %v176, %v679
        %v691 = vadd.f32 %v177, %v679
        %v692 = vadd.f32 %v178, %v679
        %v693 = vadd.f32 %v179, %v679
        %v694 = vadd.f32 %v180, %v679
        %v695 = vadd.f32 %v181, %v679
        %v696 = vadd.f32 %v182, %v679
        %v697 = vadd.f32 %v183, %v679
        %v698 = vadd.f32 %v184, %v679
        %v699 = vadd.f32 %v185, %v679
        %v700 = vadd.f32 %v186, %v679
        %v701 = vadd.f32 %v187, %v679
        %v702 = vadd.f32 %v188, %v679
        %v703 = vadd.f32 %v189, %v679
        %v704 = vadd.f32 %v190, %v679
        %v705 = vadd.f32 %v191, %v679
        %v706 = vadd.f32 %v192, %v679
        %v707 = vadd.f32 %v193, %v679
        %v708 = vadd.f32 %v194, %v679
        %v709 = vadd.f32 %v195, %v679
        %v710 = vadd.f32 %v196, %v679
        %v711 = vadd.f32 %v197, %v679
        %v712 = vadd.f32 %v198, %v679
        %v713 = vadd.f32 %v199, %v679
        %v714 = vadd.f32 %v200, %v679
        %v715 = vadd.f32 %v201, %v679
        %v716 = vadd.f32 %v202, %v679
        %v717 = vadd.f32 %v203, %v679
        %v718 = vadd.f32 %v204, %v679
        %v719 = vadd.f32 %v205, %v679
        %v720 = vadd.f32 %v206, %v679
        %v721 = vadd.f32 %v207, %v679
        %v722 = vadd.f32 %v208, %v679
        %v723 = vadd.f32 %v209, %v679
        %v724 = vadd.f32 %v210, %v679
        %v725 = vadd.f32 %v211, %v679
        %v726 = vadd.f32 %v212, %v679
        %v727 = vadd.f32 %v213, %v679
        %v728 = vadd.f32 %v214, %v679
        %v729 = vadd.f32 %v215, %v679
        %v730 = vadd.f32 %v216, %v679
        %v731 = vadd.f32 %v217, %v679
        %v732 = vadd.f32 %v218, %v679
        %v733 = vadd.f32 %v219, %v679
        %v734 = vadd.f32 %v220, %v679
        %v735 = vadd.f32 %v221, %v679
        %v736 = vadd.f32 %v222, %v679
        %v737 = vadd.f32 %v223, %v679
        %v738 = vadd.f32 %v224, %v679
        %v739 = vadd.f32 %v225, %v679
        %v740 = vadd.f32 %v226, %v679
        %v741 = vadd.f32 %v227, %v679
        %v742 = vadd.f32 %v228, %v679
        %v743 = vadd.f32 %v229, %v679
        %v744 = vadd.f32 %v230, %v679
        %v745 = vadd.f32 %v231, %v679
        %v746 = vadd.f32 %v232, %v679
        %v747 = vadd.f32 %v233, %v679
        %v748 = vadd.f32 %v234, %v679
        %v749 = vadd.f32 %v235, %v679
        %v750 = vadd.f32 %v236, %v679
        %v751 = vadd.f32 %v237, %v679
        %v752 = vadd.f32 %v238, %v679
        %v753 = vadd.f32 %v239, %v679
        %v754 = vadd.f32 %v240, %v679
        %v755 = vadd.f32 %v241, %v679
        %v756 = vadd.f32 %v242, %v679
        %v757 = vadd.f32 %v243, %v679
        %v758 = vadd.f32 %v244, %v679
        %v759 = vadd.f32 %v245, %v679
        %v760 = vadd.f32 %v246, %v679
        %v761 = vadd.f32 %v247, %v679
        %v762 = vadd.f32 %v248, %v679
        %v763 = vadd.f32 %v249, %v679
        %v764 = vadd.f32 %v250, %v679
        %v765 = vadd.f32 %v251, %v679
        %v766 = vadd.f32 %v252, %v679
        %v767 = vadd.f32 %v253, %v679
        %v768 = vadd.f32 %v254, %v679
        %v769 = vadd.f32 %v255, %v679
        %v770 = vadd.f32 %v256, %v679
        %v771 = vadd.f32 %v257, %v679
        %v772 = vadd.f32 %v258, %v679
        %v773 = vadd.f32 %v259, %v679
        %v774 = vadd.f32 %v260, %v679
        %v775 = vadd.f32 %v261, %v679
        %v776 = vadd.f32 %v262, %v679
        %v777 = vadd.f32 %v263, %v679
        %v778 = vadd.f32 %v264, %v679
        %v779 = vadd.f32 %v265, %v679
        %v780 = vadd.f32 %v266, %v679
        %v781 = vadd.f32 %v267, %v679
        %v782 = vadd.f32 %v268, %v679
        %v783 = vadd.f32 %v269, %v679
        %v784 = vadd.f32 %v270, %v679
        %v785 = vadd.f32 %v271, %v679
        %v786 = vadd.f32 %v272, %v679
        %v787 = vadd.f32 %v273, %v679
        %v788 = vadd.f32 %v274, %v679
        %v789 = vadd.f32 %v275, %v679
        %v790 = vadd.f32 %v276, %v679
        %v791 = vadd.f32 %v277, %v679
        %v792 = vadd.f32 %v278, %v679
        %v793 = vadd.f32 %v279, %v679
        %v794 = vadd.f32 %v280, %v679
        %v795 = vadd.f32 %v281, %v679
        %v796 = vadd.f32 %v282, %v679
        %v797 = vadd.f32 %v283, %v679
        %v798 = vadd.f32 %v284, %v679
        %v799 = vadd.f32 %v285, %v679
        %v800 = vadd.f32 %v286, %v679
        %v801 = vadd.f32 %v287, %v679
        %v802 = vadd.f32 %v288, %v679
        %v803 = vadd.f32 %v289, %v679
        %v804 = vadd.f32 %v290, %v679
        %v805 = vadd.f32 %v291, %v679
        %v806 = vadd.f32 %v292, %v679
        %v807 = vadd.f32 %v293, %v679
        %v808 = vadd.f32 %v294, %v679
        %v809 = vadd.f32 %v295, %v679
        %v810 = vadd.f32 %v296, %v679
        %v811 = vadd.f32 %v297, %v679
        %v812 = vadd.f32 %v298, %v679
        %v813 = vadd.f32 %v299, %v679
        %v814 = vadd.f32 %v300, %v679
        %v815 = vadd.f32 %v301, %v679
        %v816 = vadd.f32 %v302, %v679
        %v817 = vadd.f32 %v303, %v679
        %v818 = vadd.f32 %v304, %v679
        %v819 = vadd.f32 %v305, %v679
        %v820 = vadd.f32 %v306, %v679
        %v821 = vadd.f32 %v307, %v679
        %v822 = vadd.f32 %v308, %v679
        %v823 = vadd.f32 %v309, %v679
        %v824 = vadd.f32 %v310, %v679
        %v825 = vadd.f32 %v311, %v679
        %v826 = vadd.f32 %v312, %v679
        %v827 = vadd.f32 %v313, %v679
        %v828 = vadd.f32 %v314, %v679
        %v829 = vadd.f32 %v315, %v679
        %v830 = vadd.f32 %v316, %v679
        %v831 = vadd.f32 %v317, %v679
        %v832 = vadd.f32 %v318, %v679
        %v833 = vadd.f32 %v319, %v679
        %v834 = vadd.f32 %v320, %v679
        %v835 = vadd.f32 %v321, %v679
        %v836 = vadd.f32 %v322, %v679
        %v837 = vadd.f32 %v323, %v679
        %v838 = vadd.f32 %v324, %v679
        %v839 = vadd.f32 %v325, %v679
        %v840 = vadd.f32 %v326, %v679
        %v841 = vadd.f32 %v327, %v679
        %v842 = vadd.f32 %v328, %v679
        %v843 = vadd.f32 %v329, %v679
        %v844 = vadd.f32 %v330, %v679
        %v845 = vadd.f32 %v331, %v679
        %v846 = vadd.f32 %v332, %v679
        %v847 = vadd.f32 %v333, %v679
        %v848 = vadd.f32 %v334, %v679
        %v849 = vadd.f32 %v335, %v679
        %v850 = vadd.f32 %v336, %v679
        %v851 = vadd.f32 %v337, %v679
        %v852 = vadd.f32 %v338, %v679
        %v853 = vadd.f32 %v339, %v679
        %v854 = vadd.f32 %v340, %v679
        %v855 = vadd.f32 %v341, %v679
        %v856 = vadd.f32 %v342, %v679
        %v857 = vadd.f32 %v343, %v679
        %v858 = vadd.f32 %v344, %v679
        %v859 = vadd.f32 %v345, %v679
        %v860 = vadd.f32 %v346, %v679
        %v861 = vadd.f32 %v347, %v679
        %v862 = vadd.f32 %v348, %v679
        %v863 = vadd.f32 %v349, %v679
        %v864 = vadd.f32 %v350, %v679
        %v865 = vadd.f32 %v351, %v679
        %v866 = vadd.f32 %v352, %v679
        %v867 = vadd.f32 %v353, %v679
        %v868 = vadd.f32 %v354, %v679
        %v869 = vadd.f32 %v355, %v679
        %v870 = vadd.f32 %v356, %v679
        %v871 = vadd.f32 %v357, %v679
        %v872 = vadd.f32 %v358, %v679
        %v873 = vadd.f32 %v359, %v679
        %v874 = vadd.f32 %v360, %v679
        %v875 = vadd.f32 %v361, %v679
        %v876 = vadd.f32 %v362, %v679
        %v877 = vadd.f32 %v363, %v679
        %v878 = vadd.f32 %v364, %v679
        %v879 = vadd.f32 %v365, %v679
        %v880 = vadd.f32 %v366, %v679
        %v881 = vadd.f32 %v367, %v679
        %v882 = vadd.f32 %v368, %v679
        %v883 = vadd.f32 %v369, %v679
        %v884 = vadd.f32 %v370, %v679
        %v885 = vadd.f32 %v371, %v679
        %v886 = vadd.f32 %v372, %v679
        %v887 = vadd.f32 %v373, %v679
        %v888 = vadd.f32 %v374, %v679
        %v889 = vadd.f32 %v375, %v679
        %v890 = vadd.f32 %v376, %v679
        %v891 = vadd.f32 %v377, %v679
        %v892 = vadd.f32 %v378, %v679
        %v893 = vadd.f32 %v379, %v679
        %v894 = vadd.f32 %v380, %v679
        %v895 = vadd.f32 %v381, %v679
        %v896 = vadd.f32 %v382, %v679
        %v897 = vadd.f32 %v383, %v679
        %v898 = vadd.f32 %v384, %v679
        %v899 = vadd.f32 %v385, %v679
        %v900 = vadd.f32 %v386, %v679
        %v901 = vadd.f32 %v387, %v679
        %v902 = vadd.f32 %v388, %v679
        %v903 = vadd.f32 %v389, %v679
        %v904 = vadd.f32 %v390, %v679
        %v905 = vadd.f32 %v391, %v679
        %v906 = vadd.f32 %v392, %v679
        %v907 = vadd.f32 %v393, %v679
        %v908 = vadd.f32 %v394, %v679
        %v909 = vadd.f32 %v395, %v679
        %v910 = vadd.f32 %v396, %v679
        %v911 = vadd.f32 %v397, %v679
        %v912 = vadd.f32 %v398, %v679
        %v913 = vadd.f32 %v399, %v679
        %v914 = vadd.f32 %v400, %v679
        %v915 = vadd.f32 %v401, %v679
        %v916 = vadd.f32 %v402, %v679
        %v917 = vadd.f32 %v403, %v679
        %v918 = vadd.f32 %v404, %v679
        %v919 = vadd.f32 %v405, %v679
        %v920 = vadd.f32 %v406, %v679
        %v921 = vadd.f32 %v407, %v679
        %v922 = vadd.f32 %v408, %v679
        %v923 = vadd.f32 %v409, %v679
        %v924 = vadd.f32 %v410, %v679
        %v925 = vadd.f32 %v411, %v679
        %v926 = vadd.f32 %v412, %v679
        %v927 = vadd.f32 %v413, %v679
        %v928 = vadd.f32 %v414, %v679
        %v929 = vadd.f32 %v415, %v679
        %v930 = vadd.f32 %v416, %v679
        %v931 = vadd.f32 %v417, %v679
        %v932 = vadd.f32 %v418, %v679
        %v933 = vadd.f32 %v419, %v679
        %v934 = vadd.f32 %v420, %v679
        %v935 = vadd.f32 %v421, %v679
        %v936 = vadd.f32 %v422, %v679
        %v937 = vadd.f32 %v423, %v679
        %v938 = vadd.f32 %v424, %v679
        %v939 = vadd.f32 %v425, %v679
        %v940 = vadd.f32 %v426, %v679
        %v941 = vadd.f32 %v427, %v679
        %v942 = vadd.f32 %v428, %v679
        %v943 = vadd.f32 %v429, %v679
        %v944 = vadd.f32 %v430, %v679
        %v945 = vadd.f32 %v431, %v679
        %v946 = vadd.f32 %v432, %v679
        %v947 = vadd.f32 %v433, %v679
        %v948 = vadd.f32 %v434, %v679
        %v949 = vadd.f32 %v435, %v679
        %v950 = vadd.f32 %v436, %v679
        %v951 = vadd.f32 %v437, %v679
        %v952 = vadd.f32 %v438, %v679
        %v953 = vadd.f32 %v439, %v679
        %v954 = vadd.f32 %v440, %v679
        %v955 = vadd.f32 %v441, %v679
        %v956 = vadd.f32 %v442, %v679
        %v957 = vadd.f32 %v443, %v679
        %v958 = vadd.f32 %v444, %v679
        %v959 = vadd.f32 %v445, %v679
        %v960 = vadd.f32 %v446, %v679
        %v961 = vadd.f32 %v447, %v679
        %v962 = vadd.f32 %v448, %v679
        %v963 = vadd.f32 %v449, %v679
        %v964 = vadd.f32 %v450, %v679
        %v965 = vadd.f32 %v451, %v679
        %v966 = vadd.f32 %v452, %v679
        %v967 = vadd.f32 %v453, %v679
        %v968 = vadd.f32 %v454, %v679
        %v969 = vadd.f32 %v455, %v679
        %v970 = vadd.f32 %v456, %v679
        %v971 = vadd.f32 %v457, %v679
        %v972 = vadd.f32 %v458, %v679
        %v973 = vadd.f32 %v459, %v679
        %v974 = vadd.f32 %v460, %v679
        %v975 = vadd.f32 %v461, %v679
        %v976 = vadd.f32 %v462, %v679
        %v977 = vadd.f32 %v463, %v679
        %v978 = vadd.f32 %v464, %v679
        %v979 = vadd.f32 %v465, %v679
        %v980 = vadd.f32 %v466, %v679
        %v981 = vadd.f32 %v467, %v679
        %v982 = vadd.f32 %v468, %v679
        %v983 = vadd.f32 %v469, %v679
        %v984 = vadd.f32 %v470, %v679
        %v985 = vadd.f32 %v471, %v679
        %v986 = vadd.f32 %v472, %v679
        %v987 = vadd.f32 %v473, %v679
        %v988 = vadd.f32 %v474, %v679
        %v989 = vadd.f32 %v475, %v679
        %v990 = vadd.f32 %v476, %v679
        %v991 = vadd.f32 %v477, %v679
        %v992 = vadd.f32 %v478, %v679
        %v993 = vadd.f32 %v479, %v679
        %v994 = vadd.f32 %v480, %v679
        %v995 = vadd.f32 %v481, %v679
        %v996 = vadd.f32 %v482, %v679
        %v997 = vadd.f32 %v483, %v679
        %v998 = vadd.f32 %v484, %v679
        %v999 = vadd.f32 %v485, %v679
        %v1000 = vadd.f32 %v486, %v679
        %v1001 = vadd.f32 %v487, %v679
        %v1002 = vadd.f32 %v488, %v679
        %v1003 = vadd.f32 %v489, %v679
        %v1004 = vadd.f32 %v490, %v679
        %v1005 = vadd.f32 %v491, %v679
        %v1006 = vadd.f32 %v492, %v679
        %v1007 = vadd.f32 %v493, %v679
        %v1008 = vadd.f32 %v494, %v679
        %v1009 = vadd.f32 %v495, %v679
        %v1010 = vadd.f32 %v496, %v679
        %v1011 = vadd.f32 %v497, %v679
        %v1012 = vadd.f32 %v498, %v679
        %v1013 = vadd.f32 %v499, %v679
        %v1014 = vadd.f32 %v500, %v679
        %v1015 = vadd.f32 %v501, %v679
        %v1016 = vadd.f32 %v502, %v679
        %v1017 = vadd.f32 %v503, %v679
        %v1018 = vadd.f32 %v504, %v679
        %v1019 = vadd.f32 %v505, %v679
        %v1020 = vadd.f32 %v506, %v679
        %v1021 = vadd.f32 %v507, %v679
        %v1022 = vadd.f32 %v508, %v679
        %v1023 = vadd.f32 %v509, %v679
        %v1024 = vadd.f32 %v510, %v679
        %v1025 = vadd.f32 %v511, %v679
        %v1026 = vadd.f32 %v512, %v679
        %v1027 = vadd.f32 %v513, %v679
        %v1028 = vadd.f32 %v514, %v679
        %v1029 = vadd.f32 %v515, %v679
        %v1030 = vadd.f32 %v516, %v679
        %v1031 = vadd.f32 %v517, %v679
        %v1032 = vadd.f32 %v518, %v679
        %v1033 = vadd.f32 %v519, %v679
        %v1034 = vadd.f32 %v520, %v679
        %v1035 = vadd.f32 %v521, %v679
        %v1036 = vadd.f32 %v522, %v679
        %v1037 = vadd.f32 %v523, %v679
        %v1038 = vadd.f32 %v524, %v679
        %v1039 = vadd.f32 %v525, %v679
        %v1040 = vadd.f32 %v526, %v679
        %v1041 = vadd.f32 %v527, %v679
        %v1042 = vadd.f32 %v528, %v679
        %v1043 = vadd.f32 %v529, %v679
        %v1044 = vadd.f32 %v530, %v679
        %v1045 = vadd.f32 %v531, %v679
        %v1046 = vadd.f32 %v532, %v679
        %v1047 = vadd.f32 %v533, %v679
        %v1048 = vadd.f32 %v534, %v679
        %v1049 = vadd.f32 %v535, %v679
        %v1050 = vadd.f32 %v536, %v679
        %v1051 = vadd.f32 %v537, %v679
        %v1052 = vadd.f32 %v538, %v679
        %v1053 = vadd.f32 %v539, %v679
        %v1054 = vadd.f32 %v540, %v679
        %v1055 = vadd.f32 %v541, %v679
        %v1056 = vadd.f32 %v542, %v679
        %v1057 = vadd.f32 %v543, %v679
        %v1058 = vadd.f32 %v544, %v679
        %v1059 = vadd.f32 %v545, %v679
        %v1060 = vadd.f32 %v546, %v679
        %v1061 = vadd.f32 %v547, %v679
        %v1062 = vadd.f32 %v548, %v679
        %v1063 = vadd.f32 %v549, %v679
        %v1064 = vadd.f32 %v550, %v679
        %v1065 = vadd.f32 %v551, %v679
        %v1066 = vadd.f32 %v552, %v679
        %v1067 = vadd.f32 %v553, %v679
        %v1068 = vadd.f32 %v554, %v679
        %v1069 = vadd.f32 %v555, %v679
        %v1070 = vadd.f32 %v556, %v679
        %v1071 = vadd.f32 %v557, %v679
        %v1072 = vadd.f32 %v558, %v679
        %v1073 = vadd.f32 %v559, %v679
        %v1074 = vadd.f32 %v560, %v679
        %v1075 = vadd.f32 %v561, %v679
        %v1076 = vadd.f32 %v562, %v679
        %v1077 = vadd.f32 %v563, %v679
        %v1078 = vadd.f32 %v564, %v679
        %v1079 = vadd.f32 %v565, %v679
        %v1080 = vadd.f32 %v566, %v679
        %v1081 = vadd.f32 %v567, %v679
        %v1082 = vadd.f32 %v568, %v679
        %v1083 = vadd.f32 %v569, %v679
        %v1084 = vadd.f32 %v570, %v679
        %v1085 = vadd.f32 %v571, %v679
        %v1086 = vadd.f32 %v572, %v679
        %v1087 = vadd.f32 %v573, %v679
        %v1088 = vadd.f32 %v574, %v679
        %v1089 = vadd.f32 %v575, %v679
        %v1090 = vadd.f32 %v576, %v679
        %v1091 = vadd.f32 %v577, %v679
        %v1092 = vadd.f32 %v578, %v679
        %v1093 = vadd.f32 %v579, %v679
        %v1094 = vadd.f32 %v580, %v679
        %v1095 = vadd.f32 %v581, %v679
        %v1096 = vadd.f32 %v582, %v679
        %v1097 = vadd.f32 %v583, %v679
        %v1098 = vadd.f32 %v584, %v679
        %v1099 = vadd.f32 %v585, %v679
        %v1100 = vadd.f32 %v586, %v679
        %v1101 = vadd.f32 %v587, %v679
        %v1102 = vadd.f32 %v588, %v679
        %v1103 = vadd.f32 %v589, %v679
        %v1104 = vadd.f32 %v590, %v679
        %v1105 = vadd.f32 %v591, %v679
        %v1106 = vadd.f32 %v592, %v679
        %v1107 = vadd.f32 %v593, %v679
        %v1108 = vadd.f32 %v594, %v679
        %v1109 = vadd.f32 %v595, %v679
        %v1110 = vadd.f32 %v596, %v679
        %v1111 = vadd.f32 %v597, %v679
        %v1112 = vadd.f32 %v598, %v679
        %v1113 = vadd.f32 %v599, %v679
        %v1114 = vadd.f32 %v600, %v679
        %v1115 = vadd.f32 %v601, %v679
        %v1116 = vadd.f32 %v602, %v679
        %v1117 = vadd.f32 %v603, %v679
        %v1118 = vadd.f32 %v604, %v679
        %v1119 = vadd.f32 %v605, %v679
        %v1120 = vadd.f32 %v606, %v679
        %v1121 = vadd.f32 %v607, %v679
        %v1122 = vadd.f32 %v608, %v679
        %v1123 = vadd.f32 %v609, %v679
        %v1124 = vadd.f32 %v610, %v679
        %v1125 = vadd.f32 %v611, %v679
        %v1126 = vadd.f32 %v612, %v679
        %v1127 = vadd.f32 %v613, %v679
        %v1128 = vadd.f32 %v614, %v679
        %v1129 = vadd.f32 %v615, %v679
        %v1130 = vadd.f32 %v616, %v679
        %v1131 = vadd.f32 %v617, %v679
        %v1132 = vadd.f32 %v618, %v679
        %v1133 = vadd.f32 %v619, %v679
        %v1134 = vadd.f32 %v620, %v679
        %v1135 = vadd.f32 %v621, %v679
        %v1136 = vadd.f32 %v622, %v679
        %v1137 = vadd.f32 %v623, %v679
        %v1138 = vadd.f32 %v624, %v679
        %v1139 = vadd.f32 %v625, %v679
        %v1140 = vadd.f32 %v626, %v679
        %v1141 = vadd.f32 %v627, %v679
        %v1142 = vadd.f32 %v628, %v679
        %v1143 = vadd.f32 %v629, %v679
        %v1144 = vadd.f32 %v630, %v679
        %v1145 = vadd.f32 %v631, %v679
        %v1146 = vadd.f32 %v632, %v679
        %v1147 = vadd.f32 %v633, %v679
        %v1148 = vadd.f32 %v634, %v679
        %v1149 = vadd.f32 %v635, %v679
        %v1150 = vadd.f32 %v636, %v679
        %v1151 = vadd.f32 %v637, %v679
        %v1152 = vadd.f32 %v638, %v679
        %v1153 = vadd.f32 %v639, %v679
        %v1154 = vadd.f32 %v640, %v679
        %v1155 = vadd.f32 %v641, %v679
        %v1156 = vadd.f32 %v642, %v679
        %v1157 = vadd.f32 %v643, %v679
        %v1158 = vadd.f32 %v644, %v679
        %v1159 = vadd.f32 %v645, %v679
        %v1160 = vadd.f32 %v646, %v679
        %v1161 = vadd.f32 %v647, %v679
        %v1162 = vadd.f32 %v648, %v679
        %v1163 = vadd.f32 %v649, %v679
        %v1164 = vadd.f32 %v650, %v679
        %v1165 = vadd.f32 %v651, %v679
        %v1166 = vadd.f32 %v652, %v679
        %v1167 = vadd.f32 %v653, %v679
        %v1168 = vadd.f32 %v654, %v679
        %v1169 = vadd.f32 %v655, %v679
        %v1170 = vadd.f32 %v656, %v679
        %v1171 = vadd.f32 %v657, %v679
        %v1172 = vadd.f32 %v658, %v679
        %v1173 = vadd.f32 %v659, %v679
        %v1174 = vadd.f32 %v660, %v679
        %v1175 = vadd.f32 %v661, %v679
        %v1176 = vadd.f32 %v662, %v679
        %v1177 = vadd.f32 %v663, %v679
        %v1178 = vadd.f32 %v664, %v679
        %v1179 = vadd.f32 %v665, %v679
        %v1180 = vadd.f32 %v666, %v679
        %v1181 = vadd.f32 %v667, %v679
        %v1182 = vadd.f32 %v668, %v679
        %v1183 = vadd.f32 %v669, %v679
        %v1184 = vadd.f32 %v670, %v679
        %v1185 = vadd.f32 %v671, %v679
        %v1186 = vadd.f32 %v672, %v679
        %v1187 = vadd.f32 %v673, %v679
        %v1188 = vadd.f32 %v674, %v679
        %v1189 = vadd.f32 %v675, %v679
        %v1190 = vadd.f32 %v676, %v679
        %v1191 = vadd.f32 %v677, %v679
        %1192 = vst [vmem:[%s163] sm:$0xff] %v680
        %1193 = vst [vmem:[%s163 + $0x8] sm:$0xff] %v681
        %1194 = vst [vmem:[%s163 + $0x10] sm:$0xff] %v682
        %1195 = vst [vmem:[%s163 + $0x18] sm:$0xff] %v683
        %1196 = vst [vmem:[%s163 + $0x20] sm:$0xff] %v684
        %1197 = vst [vmem:[%s163 + $0x28] sm:$0xff] %v685
        %1198 = vst [vmem:[%s163 + $0x30] sm:$0xff] %v686
        %1199 = vst [vmem:[%s163 + $0x38] sm:$0xff] %v687
        %1200 = vst [vmem:[%s163 + $0x40] sm:$0xff] %v688
        %1201 = vst [vmem:[%s163 + $0x48] sm:$0xff] %v689
        %1202 = vst [vmem:[%s163 + $0x50] sm:$0xff] %v690
        %1203 = vst [vmem:[%s163 + $0x58] sm:$0xff] %v691
        %1204 = vst [vmem:[%s163 + $0x60] sm:$0xff] %v692
        %1205 = vst [vmem:[%s163 + $0x68] sm:$0xff] %v693
        %1206 = vst [vmem:[%s163 + $0x70] sm:$0xff] %v694
        %1207 = vst [vmem:[%s163 + $0x78] sm:$0xff] %v695
        %1208 = vst [vmem:[%s163 + $0x80] sm:$0xff] %v696
        %1209 = vst [vmem:[%s163 + $0x88] sm:$0xff] %v697
        %1210 = vst [vmem:[%s163 + $0x90] sm:$0xff] %v698
        %1211 = vst [vmem:[%s163 + $0x98] sm:$0xff] %v699
        %1212 = vst [vmem:[%s163 + $0xa0] sm:$0xff] %v700
        %1213 = vst [vmem:[%s163 + $0xa8] sm:$0xff] %v701
        %1214 = vst [vmem:[%s163 + $0xb0] sm:$0xff] %v702
        %1215 = vst [vmem:[%s163 + $0xb8] sm:$0xff] %v703
        %1216 = vst [vmem:[%s163 + $0xc0] sm:$0xff] %v704
        %1217 = vst [vmem:[%s163 + $0xc8] sm:$0xff] %v705
        %1218 = vst [vmem:[%s163 + $0xd0] sm:$0xff] %v706
        %1219 = vst [vmem:[%s163 + $0xd8] sm:$0xff] %v707
        %1220 = vst [vmem:[%s163 + $0xe0] sm:$0xff] %v708
        %1221 = vst [vmem:[%s163 + $0xe8] sm:$0xff] %v709
        %1222 = vst [vmem:[%s163 + $0xf0] sm:$0xff] %v710
        %1223 = vst [vmem:[%s163 + $0xf8] sm:$0xff] %v711
        %1224 = vst [vmem:[%s163 + $0x100] sm:$0xff] %v712
        %1225 = vst [vmem:[%s163 + $0x108] sm:$0xff] %v713
        %1226 = vst [vmem:[%s163 + $0x110] sm:$0xff] %v714
        %1227 = vst [vmem:[%s163 + $0x118] sm:$0xff] %v715
        %1228 = vst [vmem:[%s163 + $0x120] sm:$0xff] %v716
        %1229 = vst [vmem:[%s163 + $0x128] sm:$0xff] %v717
        %1230 = vst [vmem:[%s163 + $0x130] sm:$0xff] %v718
        %1231 = vst [vmem:[%s163 + $0x138] sm:$0xff] %v719
        %1232 = vst [vmem:[%s163 + $0x140] sm:$0xff] %v720
        %1233 = vst [vmem:[%s163 + $0x148] sm:$0xff] %v721
        %1234 = vst [vmem:[%s163 + $0x150] sm:$0xff] %v722
        %1235 = vst [vmem:[%s163 + $0x158] sm:$0xff] %v723
        %1236 = vst [vmem:[%s163 + $0x160] sm:$0xff] %v724
        %1237 = vst [vmem:[%s163 + $0x168] sm:$0xff] %v725
        %1238 = vst [vmem:[%s163 + $0x170] sm:$0xff] %v726
        %1239 = vst [vmem:[%s163 + $0x178] sm:$0xff] %v727
        %1240 = vst [vmem:[%s163 + $0x180] sm:$0xff] %v728
        %1241 = vst [vmem:[%s163 + $0x188] sm:$0xff] %v729
        %1242 = vst [vmem:[%s163 + $0x190] sm:$0xff] %v730
        %1243 = vst [vmem:[%s163 + $0x198] sm:$0xff] %v731
        %1244 = vst [vmem:[%s163 + $0x1a0] sm:$0xff] %v732
        %1245 = vst [vmem:[%s163 + $0x1a8] sm:$0xff] %v733
        %1246 = vst [vmem:[%s163 + $0x1b0] sm:$0xff] %v734
        %1247 = vst [vmem:[%s163 + $0x1b8] sm:$0xff] %v735
        %1248 = vst [vmem:[%s163 + $0x1c0] sm:$0xff] %v736
        %1249 = vst [vmem:[%s163 + $0x1c8] sm:$0xff] %v737
        %1250 = vst [vmem:[%s163 + $0x1d0] sm:$0xff] %v738
        %1251 = vst [vmem:[%s163 + $0x1d8] sm:$0xff] %v739
        %1252 = vst [vmem:[%s163 + $0x1e0] sm:$0xff] %v740
        %1253 = vst [vmem:[%s163 + $0x1e8] sm:$0xff] %v741
        %1254 = vst [vmem:[%s163 + $0x1f0] sm:$0xff] %v742
        %1255 = vst [vmem:[%s163 + $0x1f8] sm:$0xff] %v743
        %1256 = vst [vmem:[%s163 + $0x200] sm:$0xff] %v744
        %1257 = vst [vmem:[%s163 + $0x208] sm:$0xff] %v745
        %1258 = vst [vmem:[%s163 + $0x210] sm:$0xff] %v746
        %1259 = vst [vmem:[%s163 + $0x218] sm:$0xff] %v747
        %1260 = vst [vmem:[%s163 + $0x220] sm:$0xff] %v748
        %1261 = vst [vmem:[%s163 + $0x228] sm:$0xff] %v749
        %1262 = vst [vmem:[%s163 + $0x230] sm:$0xff] %v750
        %1263 = vst [vmem:[%s163 + $0x238] sm:$0xff] %v751
        %1264 = vst [vmem:[%s163 + $0x240] sm:$0xff] %v752
        %1265 = vst [vmem:[%s163 + $0x248] sm:$0xff] %v753
        %1266 = vst [vmem:[%s163 + $0x250] sm:$0xff] %v754
        %1267 = vst [vmem:[%s163 + $0x258] sm:$0xff] %v755
        %1268 = vst [vmem:[%s163 + $0x260] sm:$0xff] %v756
        %1269 = vst [vmem:[%s163 + $0x268] sm:$0xff] %v757
        %1270 = vst [vmem:[%s163 + $0x270] sm:$0xff] %v758
        %1271 = vst [vmem:[%s163 + $0x278] sm:$0xff] %v759
        %1272 = vst [vmem:[%s163 + $0x280] sm:$0xff] %v760
        %1273 = vst [vmem:[%s163 + $0x288] sm:$0xff] %v761
        %1274 = vst [vmem:[%s163 + $0x290] sm:$0xff] %v762
        %1275 = vst [vmem:[%s163 + $0x298] sm:$0xff] %v763
        %1276 = vst [vmem:[%s163 + $0x2a0] sm:$0xff] %v764
        %1277 = vst [vmem:[%s163 + $0x2a8] sm:$0xff] %v765
        %1278 = vst [vmem:[%s163 + $0x2b0] sm:$0xff] %v766
        %1279 = vst [vmem:[%s163 + $0x2b8] sm:$0xff] %v767
        %1280 = vst [vmem:[%s163 + $0x2c0] sm:$0xff] %v768
        %1281 = vst [vmem:[%s163 + $0x2c8] sm:$0xff] %v769
        %1282 = vst [vmem:[%s163 + $0x2d0] sm:$0xff] %v770
        %1283 = vst [vmem:[%s163 + $0x2d8] sm:$0xff] %v771
        %1284 = vst [vmem:[%s163 + $0x2e0] sm:$0xff] %v772
        %1285 = vst [vmem:[%s163 + $0x2e8] sm:$0xff] %v773
        %1286 = vst [vmem:[%s163 + $0x2f0] sm:$0xff] %v774
        %1287 = vst [vmem:[%s163 + $0x2f8] sm:$0xff] %v775
        %1288 = vst [vmem:[%s163 + $0x300] sm:$0xff] %v776
        %1289 = vst [vmem:[%s163 + $0x308] sm:$0xff] %v777
        %1290 = vst [vmem:[%s163 + $0x310] sm:$0xff] %v778
        %1291 = vst [vmem:[%s163 + $0x318] sm:$0xff] %v779
        %1292 = vst [vmem:[%s163 + $0x320] sm:$0xff] %v780
        %1293 = vst [vmem:[%s163 + $0x328] sm:$0xff] %v781
        %1294 = vst [vmem:[%s163 + $0x330] sm:$0xff] %v782
        %1295 = vst [vmem:[%s163 + $0x338] sm:$0xff] %v783
        %1296 = vst [vmem:[%s163 + $0x340] sm:$0xff] %v784
        %1297 = vst [vmem:[%s163 + $0x348] sm:$0xff] %v785
        %1298 = vst [vmem:[%s163 + $0x350] sm:$0xff] %v786
        %1299 = vst [vmem:[%s163 + $0x358] sm:$0xff] %v787
        %1300 = vst [vmem:[%s163 + $0x360] sm:$0xff] %v788
        %1301 = vst [vmem:[%s163 + $0x368] sm:$0xff] %v789
        %1302 = vst [vmem:[%s163 + $0x370] sm:$0xff] %v790
        %1303 = vst [vmem:[%s163 + $0x378] sm:$0xff] %v791
        %1304 = vst [vmem:[%s163 + $0x380] sm:$0xff] %v792
        %1305 = vst [vmem:[%s163 + $0x388] sm:$0xff] %v793
        %1306 = vst [vmem:[%s163 + $0x390] sm:$0xff] %v794
        %1307 = vst [vmem:[%s163 + $0x398] sm:$0xff] %v795
        %1308 = vst [vmem:[%s163 + $0x3a0] sm:$0xff] %v796
        %1309 = vst [vmem:[%s163 + $0x3a8] sm:$0xff] %v797
        %1310 = vst [vmem:[%s163 + $0x3b0] sm:$0xff] %v798
        %1311 = vst [vmem:[%s163 + $0x3b8] sm:$0xff] %v799
        %1312 = vst [vmem:[%s163 + $0x3c0] sm:$0xff] %v800
        %1313 = vst [vmem:[%s163 + $0x3c8] sm:$0xff] %v801
        %1314 = vst [vmem:[%s163 + $0x3d0] sm:$0xff] %v802
        %1315 = vst [vmem:[%s163 + $0x3d8] sm:$0xff] %v803
        %1316 = vst [vmem:[%s163 + $0x3e0] sm:$0xff] %v804
        %1317 = vst [vmem:[%s163 + $0x3e8] sm:$0xff] %v805
        %1318 = vst [vmem:[%s163 + $0x3f0] sm:$0xff] %v806
        %1319 = vst [vmem:[%s163 + $0x3f8] sm:$0xff] %v807
        %1320 = vst [vmem:[%s163 + $0x400] sm:$0xff] %v808
        %1321 = vst [vmem:[%s163 + $0x408] sm:$0xff] %v809
        %1322 = vst [vmem:[%s163 + $0x410] sm:$0xff] %v810
        %1323 = vst [vmem:[%s163 + $0x418] sm:$0xff] %v811
        %1324 = vst [vmem:[%s163 + $0x420] sm:$0xff] %v812
        %1325 = vst [vmem:[%s163 + $0x428] sm:$0xff] %v813
        %1326 = vst [vmem:[%s163 + $0x430] sm:$0xff] %v814
        %1327 = vst [vmem:[%s163 + $0x438] sm:$0xff] %v815
        %1328 = vst [vmem:[%s163 + $0x440] sm:$0xff] %v816
        %1329 = vst [vmem:[%s163 + $0x448] sm:$0xff] %v817
        %1330 = vst [vmem:[%s163 + $0x450] sm:$0xff] %v818
        %1331 = vst [vmem:[%s163 + $0x458] sm:$0xff] %v819
        %1332 = vst [vmem:[%s163 + $0x460] sm:$0xff] %v820
        %1333 = vst [vmem:[%s163 + $0x468] sm:$0xff] %v821
        %1334 = vst [vmem:[%s163 + $0x470] sm:$0xff] %v822
        %1335 = vst [vmem:[%s163 + $0x478] sm:$0xff] %v823
        %1336 = vst [vmem:[%s163 + $0x480] sm:$0xff] %v824
        %1337 = vst [vmem:[%s163 + $0x488] sm:$0xff] %v825
        %1338 = vst [vmem:[%s163 + $0x490] sm:$0xff] %v826
        %1339 = vst [vmem:[%s163 + $0x498] sm:$0xff] %v827
        %1340 = vst [vmem:[%s163 + $0x4a0] sm:$0xff] %v828
        %1341 = vst [vmem:[%s163 + $0x4a8] sm:$0xff] %v829
        %1342 = vst [vmem:[%s163 + $0x4b0] sm:$0xff] %v830
        %1343 = vst [vmem:[%s163 + $0x4b8] sm:$0xff] %v831
        %1344 = vst [vmem:[%s163 + $0x4c0] sm:$0xff] %v832
        %1345 = vst [vmem:[%s163 + $0x4c8] sm:$0xff] %v833
        %1346 = vst [vmem:[%s163 + $0x4d0] sm:$0xff] %v834
        %1347 = vst [vmem:[%s163 + $0x4d8] sm:$0xff] %v835
        %1348 = vst [vmem:[%s163 + $0x4e0] sm:$0xff] %v836
        %1349 = vst [vmem:[%s163 + $0x4e8] sm:$0xff] %v837
        %1350 = vst [vmem:[%s163 + $0x4f0] sm:$0xff] %v838
        %1351 = vst [vmem:[%s163 + $0x4f8] sm:$0xff] %v839
        %1352 = vst [vmem:[%s163 + $0x500] sm:$0xff] %v840
        %1353 = vst [vmem:[%s163 + $0x508] sm:$0xff] %v841
        %1354 = vst [vmem:[%s163 + $0x510] sm:$0xff] %v842
        %1355 = vst [vmem:[%s163 + $0x518] sm:$0xff] %v843
        %1356 = vst [vmem:[%s163 + $0x520] sm:$0xff] %v844
        %1357 = vst [vmem:[%s163 + $0x528] sm:$0xff] %v845
        %1358 = vst [vmem:[%s163 + $0x530] sm:$0xff] %v846
        %1359 = vst [vmem:[%s163 + $0x538] sm:$0xff] %v847
        %1360 = vst [vmem:[%s163 + $0x540] sm:$0xff] %v848
        %1361 = vst [vmem:[%s163 + $0x548] sm:$0xff] %v849
        %1362 = vst [vmem:[%s163 + $0x550] sm:$0xff] %v850
        %1363 = vst [vmem:[%s163 + $0x558] sm:$0xff] %v851
        %1364 = vst [vmem:[%s163 + $0x560] sm:$0xff] %v852
        %1365 = vst [vmem:[%s163 + $0x568] sm:$0xff] %v853
        %1366 = vst [vmem:[%s163 + $0x570] sm:$0xff] %v854
        %1367 = vst [vmem:[%s163 + $0x578] sm:$0xff] %v855
        %1368 = vst [vmem:[%s163 + $0x580] sm:$0xff] %v856
        %1369 = vst [vmem:[%s163 + $0x588] sm:$0xff] %v857
        %1370 = vst [vmem:[%s163 + $0x590] sm:$0xff] %v858
        %1371 = vst [vmem:[%s163 + $0x598] sm:$0xff] %v859
        %1372 = vst [vmem:[%s163 + $0x5a0] sm:$0xff] %v860
        %1373 = vst [vmem:[%s163 + $0x5a8] sm:$0xff] %v861
        %1374 = vst [vmem:[%s163 + $0x5b0] sm:$0xff] %v862
        %1375 = vst [vmem:[%s163 + $0x5b8] sm:$0xff] %v863
        %1376 = vst [vmem:[%s163 + $0x5c0] sm:$0xff] %v864
        %1377 = vst [vmem:[%s163 + $0x5c8] sm:$0xff] %v865
        %1378 = vst [vmem:[%s163 + $0x5d0] sm:$0xff] %v866
        %1379 = vst [vmem:[%s163 + $0x5d8] sm:$0xff] %v867
        %1380 = vst [vmem:[%s163 + $0x5e0] sm:$0xff] %v868
        %1381 = vst [vmem:[%s163 + $0x5e8] sm:$0xff] %v869
        %1382 = vst [vmem:[%s163 + $0x5f0] sm:$0xff] %v870
        %1383 = vst [vmem:[%s163 + $0x5f8] sm:$0xff] %v871
        %1384 = vst [vmem:[%s163 + $0x600] sm:$0xff] %v872
        %1385 = vst [vmem:[%s163 + $0x608] sm:$0xff] %v873
        %1386 = vst [vmem:[%s163 + $0x610] sm:$0xff] %v874
        %1387 = vst [vmem:[%s163 + $0x618] sm:$0xff] %v875
        %1388 = vst [vmem:[%s163 + $0x620] sm:$0xff] %v876
        %1389 = vst [vmem:[%s163 + $0x628] sm:$0xff] %v877
        %1390 = vst [vmem:[%s163 + $0x630] sm:$0xff] %v878
        %1391 = vst [vmem:[%s163 + $0x638] sm:$0xff] %v879
        %1392 = vst [vmem:[%s163 + $0x640] sm:$0xff] %v880
        %1393 = vst [vmem:[%s163 + $0x648] sm:$0xff] %v881
        %1394 = vst [vmem:[%s163 + $0x650] sm:$0xff] %v882
        %1395 = vst [vmem:[%s163 + $0x658] sm:$0xff] %v883
        %1396 = vst [vmem:[%s163 + $0x660] sm:$0xff] %v884
        %1397 = vst [vmem:[%s163 + $0x668] sm:$0xff] %v885
        %1398 = vst [vmem:[%s163 + $0x670] sm:$0xff] %v886
        %1399 = vst [vmem:[%s163 + $0x678] sm:$0xff] %v887
        %1400 = vst [vmem:[%s163 + $0x680] sm:$0xff] %v888
        %1401 = vst [vmem:[%s163 + $0x688] sm:$0xff] %v889
        %1402 = vst [vmem:[%s163 + $0x690] sm:$0xff] %v890
        %1403 = vst [vmem:[%s163 + $0x698] sm:$0xff] %v891
        %1404 = vst [vmem:[%s163 + $0x6a0] sm:$0xff] %v892
        %1405 = vst [vmem:[%s163 + $0x6a8] sm:$0xff] %v893
        %1406 = vst [vmem:[%s163 + $0x6b0] sm:$0xff] %v894
        %1407 = vst [vmem:[%s163 + $0x6b8] sm:$0xff] %v895
        %1408 = vst [vmem:[%s163 + $0x6c0] sm:$0xff] %v896
        %1409 = vst [vmem:[%s163 + $0x6c8] sm:$0xff] %v897
        %1410 = vst [vmem:[%s163 + $0x6d0] sm:$0xff] %v898
        %1411 = vst [vmem:[%s163 + $0x6d8] sm:$0xff] %v899
        %1412 = vst [vmem:[%s163 + $0x6e0] sm:$0xff] %v900
        %1413 = vst [vmem:[%s163 + $0x6e8] sm:$0xff] %v901
        %1414 = vst [vmem:[%s163 + $0x6f0] sm:$0xff] %v902
        %1415 = vst [vmem:[%s163 + $0x6f8] sm:$0xff] %v903
        %1416 = vst [vmem:[%s163 + $0x700] sm:$0xff] %v904
        %1417 = vst [vmem:[%s163 + $0x708] sm:$0xff] %v905
        %1418 = vst [vmem:[%s163 + $0x710] sm:$0xff] %v906
        %1419 = vst [vmem:[%s163 + $0x718] sm:$0xff] %v907
        %1420 = vst [vmem:[%s163 + $0x720] sm:$0xff] %v908
        %1421 = vst [vmem:[%s163 + $0x728] sm:$0xff] %v909
        %1422 = vst [vmem:[%s163 + $0x730] sm:$0xff] %v910
        %1423 = vst [vmem:[%s163 + $0x738] sm:$0xff] %v911
        %1424 = vst [vmem:[%s163 + $0x740] sm:$0xff] %v912
        %1425 = vst [vmem:[%s163 + $0x748] sm:$0xff] %v913
        %1426 = vst [vmem:[%s163 + $0x750] sm:$0xff] %v914
        %1427 = vst [vmem:[%s163 + $0x758] sm:$0xff] %v915
        %1428 = vst [vmem:[%s163 + $0x760] sm:$0xff] %v916
        %1429 = vst [vmem:[%s163 + $0x768] sm:$0xff] %v917
        %1430 = vst [vmem:[%s163 + $0x770] sm:$0xff] %v918
        %1431 = vst [vmem:[%s163 + $0x778] sm:$0xff] %v919
        %1432 = vst [vmem:[%s163 + $0x780] sm:$0xff] %v920
        %1433 = vst [vmem:[%s163 + $0x788] sm:$0xff] %v921
        %1434 = vst [vmem:[%s163 + $0x790] sm:$0xff] %v922
        %1435 = vst [vmem:[%s163 + $0x798] sm:$0xff] %v923
        %1436 = vst [vmem:[%s163 + $0x7a0] sm:$0xff] %v924
        %1437 = vst [vmem:[%s163 + $0x7a8] sm:$0xff] %v925
        %1438 = vst [vmem:[%s163 + $0x7b0] sm:$0xff] %v926
        %1439 = vst [vmem:[%s163 + $0x7b8] sm:$0xff] %v927
        %1440 = vst [vmem:[%s163 + $0x7c0] sm:$0xff] %v928
        %1441 = vst [vmem:[%s163 + $0x7c8] sm:$0xff] %v929
        %1442 = vst [vmem:[%s163 + $0x7d0] sm:$0xff] %v930
        %1443 = vst [vmem:[%s163 + $0x7d8] sm:$0xff] %v931
        %1444 = vst [vmem:[%s163 + $0x7e0] sm:$0xff] %v932
        %1445 = vst [vmem:[%s163 + $0x7e8] sm:$0xff] %v933
        %1446 = vst [vmem:[%s163 + $0x7f0] sm:$0xff] %v934
        %1447 = vst [vmem:[%s163 + $0x7f8] sm:$0xff] %v935
        %1448 = vst [vmem:[%s163 + $0x800] sm:$0xff] %v936
        %1449 = vst [vmem:[%s163 + $0x808] sm:$0xff] %v937
        %1450 = vst [vmem:[%s163 + $0x810] sm:$0xff] %v938
        %1451 = vst [vmem:[%s163 + $0x818] sm:$0xff] %v939
        %1452 = vst [vmem:[%s163 + $0x820] sm:$0xff] %v940
        %1453 = vst [vmem:[%s163 + $0x828] sm:$0xff] %v941
        %1454 = vst [vmem:[%s163 + $0x830] sm:$0xff] %v942
        %1455 = vst [vmem:[%s163 + $0x838] sm:$0xff] %v943
        %1456 = vst [vmem:[%s163 + $0x840] sm:$0xff] %v944
        %1457 = vst [vmem:[%s163 + $0x848] sm:$0xff] %v945
        %1458 = vst [vmem:[%s163 + $0x850] sm:$0xff] %v946
        %1459 = vst [vmem:[%s163 + $0x858] sm:$0xff] %v947
        %1460 = vst [vmem:[%s163 + $0x860] sm:$0xff] %v948
        %1461 = vst [vmem:[%s163 + $0x868] sm:$0xff] %v949
        %1462 = vst [vmem:[%s163 + $0x870] sm:$0xff] %v950
        %1463 = vst [vmem:[%s163 + $0x878] sm:$0xff] %v951
        %1464 = vst [vmem:[%s163 + $0x880] sm:$0xff] %v952
        %1465 = vst [vmem:[%s163 + $0x888] sm:$0xff] %v953
        %1466 = vst [vmem:[%s163 + $0x890] sm:$0xff] %v954
        %1467 = vst [vmem:[%s163 + $0x898] sm:$0xff] %v955
        %1468 = vst [vmem:[%s163 + $0x8a0] sm:$0xff] %v956
        %1469 = vst [vmem:[%s163 + $0x8a8] sm:$0xff] %v957
        %1470 = vst [vmem:[%s163 + $0x8b0] sm:$0xff] %v958
        %1471 = vst [vmem:[%s163 + $0x8b8] sm:$0xff] %v959
        %1472 = vst [vmem:[%s163 + $0x8c0] sm:$0xff] %v960
        %1473 = vst [vmem:[%s163 + $0x8c8] sm:$0xff] %v961
        %1474 = vst [vmem:[%s163 + $0x8d0] sm:$0xff] %v962
        %1475 = vst [vmem:[%s163 + $0x8d8] sm:$0xff] %v963
        %1476 = vst [vmem:[%s163 + $0x8e0] sm:$0xff] %v964
        %1477 = vst [vmem:[%s163 + $0x8e8] sm:$0xff] %v965
        %1478 = vst [vmem:[%s163 + $0x8f0] sm:$0xff] %v966
        %1479 = vst [vmem:[%s163 + $0x8f8] sm:$0xff] %v967
        %1480 = vst [vmem:[%s163 + $0x900] sm:$0xff] %v968
        %1481 = vst [vmem:[%s163 + $0x908] sm:$0xff] %v969
        %1482 = vst [vmem:[%s163 + $0x910] sm:$0xff] %v970
        %1483 = vst [vmem:[%s163 + $0x918] sm:$0xff] %v971
        %1484 = vst [vmem:[%s163 + $0x920] sm:$0xff] %v972
        %1485 = vst [vmem:[%s163 + $0x928] sm:$0xff] %v973
        %1486 = vst [vmem:[%s163 + $0x930] sm:$0xff] %v974
        %1487 = vst [vmem:[%s163 + $0x938] sm:$0xff] %v975
        %1488 = vst [vmem:[%s163 + $0x940] sm:$0xff] %v976
        %1489 = vst [vmem:[%s163 + $0x948] sm:$0xff] %v977
        %1490 = vst [vmem:[%s163 + $0x950] sm:$0xff] %v978
        %1491 = vst [vmem:[%s163 + $0x958] sm:$0xff] %v979
        %1492 = vst [vmem:[%s163 + $0x960] sm:$0xff] %v980
        %1493 = vst [vmem:[%s163 + $0x968] sm:$0xff] %v981
        %1494 = vst [vmem:[%s163 + $0x970] sm:$0xff] %v982
        %1495 = vst [vmem:[%s163 + $0x978] sm:$0xff] %v983
        %1496 = vst [vmem:[%s163 + $0x980] sm:$0xff] %v984
        %1497 = vst [vmem:[%s163 + $0x988] sm:$0xff] %v985
        %1498 = vst [vmem:[%s163 + $0x990] sm:$0xff] %v986
        %1499 = vst [vmem:[%s163 + $0x998] sm:$0xff] %v987
        %1500 = vst [vmem:[%s163 + $0x9a0] sm:$0xff] %v988
        %1501 = vst [vmem:[%s163 + $0x9a8] sm:$0xff] %v989
        %1502 = vst [vmem:[%s163 + $0x9b0] sm:$0xff] %v990
        %1503 = vst [vmem:[%s163 + $0x9b8] sm:$0xff] %v991
        %1504 = vst [vmem:[%s163 + $0x9c0] sm:$0xff] %v992
        %1505 = vst [vmem:[%s163 + $0x9c8] sm:$0xff] %v993
        %1506 = vst [vmem:[%s163 + $0x9d0] sm:$0xff] %v994
        %1507 = vst [vmem:[%s163 + $0x9d8] sm:$0xff] %v995
        %1508 = vst [vmem:[%s163 + $0x9e0] sm:$0xff] %v996
        %1509 = vst [vmem:[%s163 + $0x9e8] sm:$0xff] %v997
        %1510 = vst [vmem:[%s163 + $0x9f0] sm:$0xff] %v998
        %1511 = vst [vmem:[%s163 + $0x9f8] sm:$0xff] %v999
        %1512 = vst [vmem:[%s163 + $0xa00] sm:$0xff] %v1000
        %1513 = vst [vmem:[%s163 + $0xa08] sm:$0xff] %v1001
        %1514 = vst [vmem:[%s163 + $0xa10] sm:$0xff] %v1002
        %1515 = vst [vmem:[%s163 + $0xa18] sm:$0xff] %v1003
        %1516 = vst [vmem:[%s163 + $0xa20] sm:$0xff] %v1004
        %1517 = vst [vmem:[%s163 + $0xa28] sm:$0xff] %v1005
        %1518 = vst [vmem:[%s163 + $0xa30] sm:$0xff] %v1006
        %1519 = vst [vmem:[%s163 + $0xa38] sm:$0xff] %v1007
        %1520 = vst [vmem:[%s163 + $0xa40] sm:$0xff] %v1008
        %1521 = vst [vmem:[%s163 + $0xa48] sm:$0xff] %v1009
        %1522 = vst [vmem:[%s163 + $0xa50] sm:$0xff] %v1010
        %1523 = vst [vmem:[%s163 + $0xa58] sm:$0xff] %v1011
        %1524 = vst [vmem:[%s163 + $0xa60] sm:$0xff] %v1012
        %1525 = vst [vmem:[%s163 + $0xa68] sm:$0xff] %v1013
        %1526 = vst [vmem:[%s163 + $0xa70] sm:$0xff] %v1014
        %1527 = vst [vmem:[%s163 + $0xa78] sm:$0xff] %v1015
        %1528 = vst [vmem:[%s163 + $0xa80] sm:$0xff] %v1016
        %1529 = vst [vmem:[%s163 + $0xa88] sm:$0xff] %v1017
        %1530 = vst [vmem:[%s163 + $0xa90] sm:$0xff] %v1018
        %1531 = vst [vmem:[%s163 + $0xa98] sm:$0xff] %v1019
        %1532 = vst [vmem:[%s163 + $0xaa0] sm:$0xff] %v1020
        %1533 = vst [vmem:[%s163 + $0xaa8] sm:$0xff] %v1021
        %1534 = vst [vmem:[%s163 + $0xab0] sm:$0xff] %v1022
        %1535 = vst [vmem:[%s163 + $0xab8] sm:$0xff] %v1023
        %1536 = vst [vmem:[%s163 + $0xac0] sm:$0xff] %v1024
        %1537 = vst [vmem:[%s163 + $0xac8] sm:$0xff] %v1025
        %1538 = vst [vmem:[%s163 + $0xad0] sm:$0xff] %v1026
        %1539 = vst [vmem:[%s163 + $0xad8] sm:$0xff] %v1027
        %1540 = vst [vmem:[%s163 + $0xae0] sm:$0xff] %v1028
        %1541 = vst [vmem:[%s163 + $0xae8] sm:$0xff] %v1029
        %1542 = vst [vmem:[%s163 + $0xaf0] sm:$0xff] %v1030
        %1543 = vst [vmem:[%s163 + $0xaf8] sm:$0xff] %v1031
        %1544 = vst [vmem:[%s163 + $0xb00] sm:$0xff] %v1032
        %1545 = vst [vmem:[%s163 + $0xb08] sm:$0xff] %v1033
        %1546 = vst [vmem:[%s163 + $0xb10] sm:$0xff] %v1034
        %1547 = vst [vmem:[%s163 + $0xb18] sm:$0xff] %v1035
        %1548 = vst [vmem:[%s163 + $0xb20] sm:$0xff] %v1036
        %1549 = vst [vmem:[%s163 + $0xb28] sm:$0xff] %v1037
        %1550 = vst [vmem:[%s163 + $0xb30] sm:$0xff] %v1038
        %1551 = vst [vmem:[%s163 + $0xb38] sm:$0xff] %v1039
        %1552 = vst [vmem:[%s163 + $0xb40] sm:$0xff] %v1040
        %1553 = vst [vmem:[%s163 + $0xb48] sm:$0xff] %v1041
        %1554 = vst [vmem:[%s163 + $0xb50] sm:$0xff] %v1042
        %1555 = vst [vmem:[%s163 + $0xb58] sm:$0xff] %v1043
        %1556 = vst [vmem:[%s163 + $0xb60] sm:$0xff] %v1044
        %1557 = vst [vmem:[%s163 + $0xb68] sm:$0xff] %v1045
        %1558 = vst [vmem:[%s163 + $0xb70] sm:$0xff] %v1046
        %1559 = vst [vmem:[%s163 + $0xb78] sm:$0xff] %v1047
        %1560 = vst [vmem:[%s163 + $0xb80] sm:$0xff] %v1048
        %1561 = vst [vmem:[%s163 + $0xb88] sm:$0xff] %v1049
        %1562 = vst [vmem:[%s163 + $0xb90] sm:$0xff] %v1050
        %1563 = vst [vmem:[%s163 + $0xb98] sm:$0xff] %v1051
        %1564 = vst [vmem:[%s163 + $0xba0] sm:$0xff] %v1052
        %1565 = vst [vmem:[%s163 + $0xba8] sm:$0xff] %v1053
        %1566 = vst [vmem:[%s163 + $0xbb0] sm:$0xff] %v1054
        %1567 = vst [vmem:[%s163 + $0xbb8] sm:$0xff] %v1055
        %1568 = vst [vmem:[%s163 + $0xbc0] sm:$0xff] %v1056
        %1569 = vst [vmem:[%s163 + $0xbc8] sm:$0xff] %v1057
        %1570 = vst [vmem:[%s163 + $0xbd0] sm:$0xff] %v1058
        %1571 = vst [vmem:[%s163 + $0xbd8] sm:$0xff] %v1059
        %1572 = vst [vmem:[%s163 + $0xbe0] sm:$0xff] %v1060
        %1573 = vst [vmem:[%s163 + $0xbe8] sm:$0xff] %v1061
        %1574 = vst [vmem:[%s163 + $0xbf0] sm:$0xff] %v1062
        %1575 = vst [vmem:[%s163 + $0xbf8] sm:$0xff] %v1063
        %1576 = vst [vmem:[%s163 + $0xc00] sm:$0xff] %v1064
        %1577 = vst [vmem:[%s163 + $0xc08] sm:$0xff] %v1065
        %1578 = vst [vmem:[%s163 + $0xc10] sm:$0xff] %v1066
        %1579 = vst [vmem:[%s163 + $0xc18] sm:$0xff] %v1067
        %1580 = vst [vmem:[%s163 + $0xc20] sm:$0xff] %v1068
        %1581 = vst [vmem:[%s163 + $0xc28] sm:$0xff] %v1069
        %1582 = vst [vmem:[%s163 + $0xc30] sm:$0xff] %v1070
        %1583 = vst [vmem:[%s163 + $0xc38] sm:$0xff] %v1071
        %1584 = vst [vmem:[%s163 + $0xc40] sm:$0xff] %v1072
        %1585 = vst [vmem:[%s163 + $0xc48] sm:$0xff] %v1073
        %1586 = vst [vmem:[%s163 + $0xc50] sm:$0xff] %v1074
        %1587 = vst [vmem:[%s163 + $0xc58] sm:$0xff] %v1075
        %1588 = vst [vmem:[%s163 + $0xc60] sm:$0xff] %v1076
        %1589 = vst [vmem:[%s163 + $0xc68] sm:$0xff] %v1077
        %1590 = vst [vmem:[%s163 + $0xc70] sm:$0xff] %v1078
        %1591 = vst [vmem:[%s163 + $0xc78] sm:$0xff] %v1079
        %1592 = vst [vmem:[%s163 + $0xc80] sm:$0xff] %v1080
        %1593 = vst [vmem:[%s163 + $0xc88] sm:$0xff] %v1081
        %1594 = vst [vmem:[%s163 + $0xc90] sm:$0xff] %v1082
        %1595 = vst [vmem:[%s163 + $0xc98] sm:$0xff] %v1083
        %1596 = vst [vmem:[%s163 + $0xca0] sm:$0xff] %v1084
        %1597 = vst [vmem:[%s163 + $0xca8] sm:$0xff] %v1085
        %1598 = vst [vmem:[%s163 + $0xcb0] sm:$0xff] %v1086
        %1599 = vst [vmem:[%s163 + $0xcb8] sm:$0xff] %v1087
        %1600 = vst [vmem:[%s163 + $0xcc0] sm:$0xff] %v1088
        %1601 = vst [vmem:[%s163 + $0xcc8] sm:$0xff] %v1089
        %1602 = vst [vmem:[%s163 + $0xcd0] sm:$0xff] %v1090
        %1603 = vst [vmem:[%s163 + $0xcd8] sm:$0xff] %v1091
        %1604 = vst [vmem:[%s163 + $0xce0] sm:$0xff] %v1092
        %1605 = vst [vmem:[%s163 + $0xce8] sm:$0xff] %v1093
        %1606 = vst [vmem:[%s163 + $0xcf0] sm:$0xff] %v1094
        %1607 = vst [vmem:[%s163 + $0xcf8] sm:$0xff] %v1095
        %1608 = vst [vmem:[%s163 + $0xd00] sm:$0xff] %v1096
        %1609 = vst [vmem:[%s163 + $0xd08] sm:$0xff] %v1097
        %1610 = vst [vmem:[%s163 + $0xd10] sm:$0xff] %v1098
        %1611 = vst [vmem:[%s163 + $0xd18] sm:$0xff] %v1099
        %1612 = vst [vmem:[%s163 + $0xd20] sm:$0xff] %v1100
        %1613 = vst [vmem:[%s163 + $0xd28] sm:$0xff] %v1101
        %1614 = vst [vmem:[%s163 + $0xd30] sm:$0xff] %v1102
        %1615 = vst [vmem:[%s163 + $0xd38] sm:$0xff] %v1103
        %1616 = vst [vmem:[%s163 + $0xd40] sm:$0xff] %v1104
        %1617 = vst [vmem:[%s163 + $0xd48] sm:$0xff] %v1105
        %1618 = vst [vmem:[%s163 + $0xd50] sm:$0xff] %v1106
        %1619 = vst [vmem:[%s163 + $0xd58] sm:$0xff] %v1107
        %1620 = vst [vmem:[%s163 + $0xd60] sm:$0xff] %v1108
        %1621 = vst [vmem:[%s163 + $0xd68] sm:$0xff] %v1109
        %1622 = vst [vmem:[%s163 + $0xd70] sm:$0xff] %v1110
        %1623 = vst [vmem:[%s163 + $0xd78] sm:$0xff] %v1111
        %1624 = vst [vmem:[%s163 + $0xd80] sm:$0xff] %v1112
        %1625 = vst [vmem:[%s163 + $0xd88] sm:$0xff] %v1113
        %1626 = vst [vmem:[%s163 + $0xd90] sm:$0xff] %v1114
        %1627 = vst [vmem:[%s163 + $0xd98] sm:$0xff] %v1115
        %1628 = vst [vmem:[%s163 + $0xda0] sm:$0xff] %v1116
        %1629 = vst [vmem:[%s163 + $0xda8] sm:$0xff] %v1117
        %1630 = vst [vmem:[%s163 + $0xdb0] sm:$0xff] %v1118
        %1631 = vst [vmem:[%s163 + $0xdb8] sm:$0xff] %v1119
        %1632 = vst [vmem:[%s163 + $0xdc0] sm:$0xff] %v1120
        %1633 = vst [vmem:[%s163 + $0xdc8] sm:$0xff] %v1121
        %1634 = vst [vmem:[%s163 + $0xdd0] sm:$0xff] %v1122
        %1635 = vst [vmem:[%s163 + $0xdd8] sm:$0xff] %v1123
        %1636 = vst [vmem:[%s163 + $0xde0] sm:$0xff] %v1124
        %1637 = vst [vmem:[%s163 + $0xde8] sm:$0xff] %v1125
        %1638 = vst [vmem:[%s163 + $0xdf0] sm:$0xff] %v1126
        %1639 = vst [vmem:[%s163 + $0xdf8] sm:$0xff] %v1127
        %1640 = vst [vmem:[%s163 + $0xe00] sm:$0xff] %v1128
        %1641 = vst [vmem:[%s163 + $0xe08] sm:$0xff] %v1129
        %1642 = vst [vmem:[%s163 + $0xe10] sm:$0xff] %v1130
        %1643 = vst [vmem:[%s163 + $0xe18] sm:$0xff] %v1131
        %1644 = vst [vmem:[%s163 + $0xe20] sm:$0xff] %v1132
        %1645 = vst [vmem:[%s163 + $0xe28] sm:$0xff] %v1133
        %1646 = vst [vmem:[%s163 + $0xe30] sm:$0xff] %v1134
        %1647 = vst [vmem:[%s163 + $0xe38] sm:$0xff] %v1135
        %1648 = vst [vmem:[%s163 + $0xe40] sm:$0xff] %v1136
        %1649 = vst [vmem:[%s163 + $0xe48] sm:$0xff] %v1137
        %1650 = vst [vmem:[%s163 + $0xe50] sm:$0xff] %v1138
        %1651 = vst [vmem:[%s163 + $0xe58] sm:$0xff] %v1139
        %1652 = vst [vmem:[%s163 + $0xe60] sm:$0xff] %v1140
        %1653 = vst [vmem:[%s163 + $0xe68] sm:$0xff] %v1141
        %1654 = vst [vmem:[%s163 + $0xe70] sm:$0xff] %v1142
        %1655 = vst [vmem:[%s163 + $0xe78] sm:$0xff] %v1143
        %1656 = vst [vmem:[%s163 + $0xe80] sm:$0xff] %v1144
        %1657 = vst [vmem:[%s163 + $0xe88] sm:$0xff] %v1145
        %1658 = vst [vmem:[%s163 + $0xe90] sm:$0xff] %v1146
        %1659 = vst [vmem:[%s163 + $0xe98] sm:$0xff] %v1147
        %1660 = vst [vmem:[%s163 + $0xea0] sm:$0xff] %v1148
        %1661 = vst [vmem:[%s163 + $0xea8] sm:$0xff] %v1149
        %1662 = vst [vmem:[%s163 + $0xeb0] sm:$0xff] %v1150
        %1663 = vst [vmem:[%s163 + $0xeb8] sm:$0xff] %v1151
        %1664 = vst [vmem:[%s163 + $0xec0] sm:$0xff] %v1152
        %1665 = vst [vmem:[%s163 + $0xec8] sm:$0xff] %v1153
        %1666 = vst [vmem:[%s163 + $0xed0] sm:$0xff] %v1154
        %1667 = vst [vmem:[%s163 + $0xed8] sm:$0xff] %v1155
        %1668 = vst [vmem:[%s163 + $0xee0] sm:$0xff] %v1156
        %1669 = vst [vmem:[%s163 + $0xee8] sm:$0xff] %v1157
        %1670 = vst [vmem:[%s163 + $0xef0] sm:$0xff] %v1158
        %1671 = vst [vmem:[%s163 + $0xef8] sm:$0xff] %v1159
        %1672 = vst [vmem:[%s163 + $0xf00] sm:$0xff] %v1160
        %1673 = vst [vmem:[%s163 + $0xf08] sm:$0xff] %v1161
        %1674 = vst [vmem:[%s163 + $0xf10] sm:$0xff] %v1162
        %1675 = vst [vmem:[%s163 + $0xf18] sm:$0xff] %v1163
        %1676 = vst [vmem:[%s163 + $0xf20] sm:$0xff] %v1164
        %1677 = vst [vmem:[%s163 + $0xf28] sm:$0xff] %v1165
        %1678 = vst [vmem:[%s163 + $0xf30] sm:$0xff] %v1166
        %1679 = vst [vmem:[%s163 + $0xf38] sm:$0xff] %v1167
        %1680 = vst [vmem:[%s163 + $0xf40] sm:$0xff] %v1168
        %1681 = vst [vmem:[%s163 + $0xf48] sm:$0xff] %v1169
        %1682 = vst [vmem:[%s163 + $0xf50] sm:$0xff] %v1170
        %1683 = vst [vmem:[%s163 + $0xf58] sm:$0xff] %v1171
        %1684 = vst [vmem:[%s163 + $0xf60] sm:$0xff] %v1172
        %1685 = vst [vmem:[%s163 + $0xf68] sm:$0xff] %v1173
        %1686 = vst [vmem:[%s163 + $0xf70] sm:$0xff] %v1174
        %1687 = vst [vmem:[%s163 + $0xf78] sm:$0xff] %v1175
        %1688 = vst [vmem:[%s163 + $0xf80] sm:$0xff] %v1176
        %1689 = vst [vmem:[%s163 + $0xf88] sm:$0xff] %v1177
        %1690 = vst [vmem:[%s163 + $0xf90] sm:$0xff] %v1178
        %1691 = vst [vmem:[%s163 + $0xf98] sm:$0xff] %v1179
        %1692 = vst [vmem:[%s163 + $0xfa0] sm:$0xff] %v1180
        %1693 = vst [vmem:[%s163 + $0xfa8] sm:$0xff] %v1181
        %1694 = vst [vmem:[%s163 + $0xfb0] sm:$0xff] %v1182
        %1695 = vst [vmem:[%s163 + $0xfb8] sm:$0xff] %v1183
        %1696 = vst [vmem:[%s163 + $0xfc0] sm:$0xff] %v1184
        %1697 = vst [vmem:[%s163 + $0xfc8] sm:$0xff] %v1185
        %1698 = vst [vmem:[%s163 + $0xfd0] sm:$0xff] %v1186
        %1699 = vst [vmem:[%s163 + $0xfd8] sm:$0xff] %v1187
        %1700 = vst [vmem:[%s163 + $0xfe0] sm:$0xff] %v1188
        %1701 = vst [vmem:[%s163 + $0xfe8] sm:$0xff] %v1189
        %1702 = vst [vmem:[%s163 + $0xff0] sm:$0xff] %v1190
        %1703 = vst [vmem:[%s163 + $0xff8] sm:$0xff] %v1191
        %s1704 = sand.u32 %s75, 1
        %s1705 = scalar_lea.sflag [#allocation5], %s1704
        %s1706 = sand.u32 %s75, 1
        %s1707 = smul.addr %s1706, 4096
        %s1708 = scalar_lea.vmem [#allocation6], %s1707
        // Predicated region
        $region33: #{tpu_custom_call.1} parent=27 // pred_check
          %p1709 = pneg %p85
        $region34: #{tpu_custom_call.1} parent=27 // pred_check_branch
          %1711 = sbr.rel (%p1709) target = $region36
        $region35: #{tpu_custom_call.1} parent=27 // pred_region
          %s1712 = smul.u32 16, %s20
          %s1714 = ssub.s32 65536, 65536
          %1715 = vsyncadd %s1705, %s1714
          %s1716 = smul.addr %s1712, 32
          %s1717 = smul.addr %s1716, 128
          %s1718 = scalar_lea.hbm %s2, %s1717
          %s1719 = sshll.u32 %s1708, 4
          %s1720 = int_to_ptr.vmem [resolvable:$true] %s1719
          %1725 = dma.vmem_to_hbm [thread:$0]  %s1720, 65536, %s1718, %s1705, 4096, 4096, 256
        $region36: #{tpu_custom_call.1} parent=27 // pred_fallthru
          _
      $region28: #{tpu_custom_call.1} parent=5 // pred_fallthru
        _
      %p1726 = scmp.le.s32.totalorder 2, %s15
      // Predicated region
      $region37: #{tpu_custom_call.1} parent=5 // pred_check
        %p1727 = pneg %p1726
      $region38: #{tpu_custom_call.1} parent=5 // pred_check_branch
        %1729 = sbr.rel (%p1727) target = $region40
      $region39: #{tpu_custom_call.1} parent=5 // pred_region
        %s1730 = ssub.s32 %s15, 2
        // Predicated region
        $region41: #{tpu_custom_call.1} parent=39 // pred_check
          %p1731 = pneg %p91
        $region42: #{tpu_custom_call.1} parent=39 // pred_check_branch
          %1733 = sbr.rel (%p1731) target = $region44
        $region43: #{tpu_custom_call.1} parent=39 // pred_region
          %s1734 = sand.u32 %s76, 1
          %s1735 = scalar_lea.sflag [#allocation5], %s1734
          %s1736 = sand.u32 %s76, 1
          %s1737 = smul.addr %s1736, 4096
          %s1738 = scalar_lea.vmem [#allocation6], %s1737
          %1739 = dma.done %s1735, 65536
        $region44: #{tpu_custom_call.1} parent=39 // pred_fallthru
          _
      $region40: #{tpu_custom_call.1} parent=5 // pred_fallthru
        _
    $region6: #{tpu_custom_call.1} parent=1 // loop_footer
      %s19 = sadd.s32 1, %s15
    $region7: #{tpu_custom_call.1} parent=1 // loop_footer_branch
      %14 = sbr.rel target = $region3
    $region8: #{tpu_custom_call.1} parent=1 // loop_exit
      _
    %1740 = vsyncpa [#allocation4], 1
    %s1741 = scalar_lea.sflag [#allocation4], 1
    %1742 = vsyncpa %s1741, 1
    %1743 = vsyncpa [#allocation5], 1
    %s1744 = scalar_lea.sflag [#allocation5], 1
    %1745 = vsyncpa %s1744, 1

</llo_original>
